<compile_context>
chip_gen: v6e
topology: v6e:2x2x1
jax: 0.10.0
libtpu: 0.0.40
codegen_flags: <defaults>
</compile_context>

<pallas_src>
import functools

import jax
import jax.numpy as jnp
from jax.experimental import pallas as pl
from jax.experimental.pallas import tpu as pltpu


def _planar_flow_gram_kernel(x_ref, w_ref, ut_ref, g_ref, b_ref, gdiag_ref,
                             z_ref, lj_ref, f_ref, t_ref, *, num_layers):
    """Apply `num_layers` planar flows to one (D, B_TILE) batch tile.

    x_ref: (D, Bt)   w_ref: (L, D)   ut_ref: (D, L)   g_ref: (L, L)
    b_ref, gdiag_ref: (L,) scalars in SMEM
    z_ref: (D, Bt)   lj_ref: (L, Bt)
    f_ref, t_ref: (L, Bt) VMEM scratch (pre-activations / tanh rows)
    """
    # F0 = W @ x  -> MXU.  Per-layer bias is added at row-read time (SMEM scalar).
    f_ref[...] = jnp.dot(w_ref[...], x_ref[...],
                         preferred_element_type=jnp.float32,
                         precision=jax.lax.Precision.HIGHEST)
    g = g_ref[...]                                       # (L, L), loaded once

    for l in range(num_layers):                          # static unroll; L small
        f_l = f_ref[l:l + 1, :] + b_ref[l]               # (1, Bt), scalar from SMEM
        t_l = jnp.tanh(f_l)                              # EUP
        # psi·u == (1 - tanh^2(f_l)) * (w_l·u_l): no per-layer (B,D) reduction.
        det = 1.0 + (1.0 - t_l * t_l) * gdiag_ref[l]
        lj_ref[l:l + 1, :] = jnp.log(jnp.abs(det) + 1e-9)   # lane-dense row
        t_ref[l:l + 1, :] = t_l
        if l + 1 < num_layers:
            # Rank-1 VPU FMA: rows m > l pick up G[m, l] * t_l.
            # (Updates to rows <= l are harmless: those rows are never re-read.)
            f_ref[...] = f_ref[...] + g[:, l:l + 1] * t_l

    # Deferred z update: one MXU matmul instead of L per-layer VPU FMAs.
    z_ref[...] = x_ref[...] + jnp.dot(ut_ref[...], t_ref[...],
                                      preferred_element_type=jnp.float32,
                                      precision=jax.lax.Precision.HIGHEST)


def _pick_b_tile(B):
    """Lane-tile heuristic: multiple of 128, capped at 512, >=2 tiles when B allows."""
    half = pl.cdiv(B, 2)                     # aim for >=2 "parallel" tiles (v7x: 2 TCs)
    return int(min(512, max(128, ((half + 127) // 128) * 128)))


def disentangling_flow_forward(x, weights, scales, biases, *, b_tile=None,
                               return_log_jacobians=False):
    """Pallas forward of DisentanglingFlow with meta=None.

    Matches the PyTorch module's interface: returns (z_out, -full_loss) with
    full_loss == 0.  Pass return_log_jacobians=True to additionally get the
    per-layer log|det J| of shape (B, L) (computed internally by the module).
    """
    B, D = x.shape
    L = weights.shape[0]

    w = weights.astype(jnp.float32)                      # (L, D)
    u = scales.astype(jnp.float32)                       # (L, D)
    b_flat = biases.reshape(L).astype(jnp.float32)       # (L,)
    # Gram matrix G[m, l] = w_m · u_l and its diagonal (w_l · u_l).
    g = jnp.dot(w, u.T, precision=jax.lax.Precision.HIGHEST)   # (L, L)
    g_diag = jnp.sum(w * u, axis=-1)                     # (L,) exact f32

    if b_tile is None:
        b_tile = _pick_b_tile(B)
    n_tiles = pl.cdiv(B, b_tile)
    B_pad = n_tiles * b_tile

    # Batch on lanes: (D, B_pad); pad only when B doesn't divide the tile.
    x_t = x.T.astype(jnp.float32)
    if B_pad != B:
        x_t = jnp.pad(x_t, ((0, 0), (0, B_pad - B)))
    ut = u.T                                             # (D, L)

    kernel = functools.partial(_planar_flow_gram_kernel, num_layers=L)

    z_t, lj_t = pl.pallas_call(
        kernel,
        grid=(n_tiles,),
        in_specs=[
            pl.BlockSpec((D, b_tile), lambda i: (0, i)),          # x tile
            pl.BlockSpec((L, D), lambda i: (0, 0)),               # W (resident)
            pl.BlockSpec((D, L), lambda i: (0, 0)),               # U^T (resident)
            pl.BlockSpec((L, L), lambda i: (0, 0)),               # Gram matrix
            pl.BlockSpec(memory_space=pltpu.MemorySpace.SMEM),    # biases
            pl.BlockSpec(memory_space=pltpu.MemorySpace.SMEM),    # diag(G) = w·u
        ],
        out_specs=(
            pl.BlockSpec((D, b_tile), lambda i: (0, i)),          # z tile
            pl.BlockSpec((L, b_tile), lambda i: (0, i)),          # log|det J|
        ),
        out_shape=(
            jax.ShapeDtypeStruct((D, B_pad), jnp.float32),
            jax.ShapeDtypeStruct((L, B_pad), jnp.float32),
        ),
        scratch_shapes=[
            pltpu.VMEM((L, b_tile), jnp.float32),        # F (pre-activations)
            pltpu.VMEM((L, b_tile), jnp.float32),        # T (tanh rows)
        ],
        compiler_params=pltpu.CompilerParams(
            dimension_semantics=("parallel",)),
    )(x_t, w, ut, g, b_flat, g_diag)

    z_out = z_t[:, :B].T                                 # (B, D)
    full_loss = jnp.float32(0.0)                         # meta is None
    if return_log_jacobians:
        return z_out, -full_loss, lj_t[:, :B].T          # (B, L)
    return z_out, -full_loss


def _reference_forward(x, weights, scales, biases):
    """Pure-JAX reference of the same planar-flow chain (batch-major)."""
    z = x.astype(jnp.float32)
    ljs = []
    for l in range(weights.shape[0]):
        w = weights[l][None, :]
        u = scales[l][None, :]
        b = biases[l, 0]
        f_z = jnp.sum(z * w, axis=-1, keepdims=True) + b
        t = jnp.tanh(f_z)
        psi = (1.0 - t * t) * w
        det_grad = 1.0 + jnp.sum(psi * u, axis=-1, keepdims=True)
        ljs.append(jnp.log(jnp.abs(det_grad) + 1e-9))
        z = z + u * t
    return z, jnp.concatenate(ljs, axis=-1)


if __name__ == "__main__":
    key = jax.random.PRNGKey(0)
    B, D, L = 8, 16, 16          # batch, latent_size, flow_length

    kx, kw, ku, kb, kx2 = jax.random.split(key, 5)
    x = jax.random.normal(kx, (B, D), dtype=jnp.float32)
    # Deterministic small-scale parameter init (PlanarFlow-style small weights).
    weights = jax.random.normal(kw, (L, D), dtype=jnp.float32) * 0.1
    scales = jax.random.normal(ku, (L, D), dtype=jnp.float32) * 0.1
    biases = jax.random.normal(kb, (L, 1), dtype=jnp.float32) * 0.1

    z_out, neg_loss, log_jac = disentangling_flow_forward(
        x, weights, scales, biases, return_log_jacobians=True)
    jax.block_until_ready((z_out, neg_loss, log_jac))

    z_ref, lj_ref = _reference_forward(x, weights, scales, biases)
    assert jnp.allclose(z_out, z_ref, atol=1e-4, rtol=1e-4)
    assert jnp.allclose(log_jac, lj_ref, atol=1e-4, rtol=1e-4)
    assert float(neg_loss) == 0.0

    # Second shape: non-multiple-of-128 batch -> exercises the padding path and
    # a 2-tile "parallel" grid (both v7x TensorCores get work).
    B2 = 200
    x2 = jax.random.normal(kx2, (B2, D), dtype=jnp.float32)
    z2, neg2, lj2 = disentangling_flow_forward(
        x2, weights, scales, biases, return_log_jacobians=True)
    jax.block_until_ready((z2, neg2, lj2))
    z2_ref, lj2_ref = _reference_forward(x2, weights, scales, biases)
    assert jnp.allclose(z2, z2_ref, atol=1e-4, rtol=1e-4)
    assert jnp.allclose(lj2, lj2_ref, atol=1e-4, rtol=1e-4)
    assert float(neg2) == 0.0

    print("KERNEL_OK")
</pallas_src>

<mosaic_0001>
module attributes {stable_mosaic.version = 11 : i64} {
  func.func @_planar_flow_gram_kernel(%arg0: i32, %arg1: memref<16x128xf32, #tpu.memory_space<vmem>>, %arg2: memref<16x16xf32, #tpu.memory_space<vmem>>, %arg3: memref<16x16xf32, #tpu.memory_space<vmem>>, %arg4: memref<16x16xf32, #tpu.memory_space<vmem>>, %arg5: memref<16xf32, #tpu.memory_space<smem>>, %arg6: memref<16xf32, #tpu.memory_space<smem>>, %arg7: memref<16x128xf32, #tpu.memory_space<vmem>>, %arg8: memref<16x128xf32, #tpu.memory_space<vmem>>, %arg9: memref<16x128xf32, #tpu.memory_space<vmem>>, %arg10: memref<16x128xf32, #tpu.memory_space<vmem>>) attributes {dimension_semantics = [#tpu.dimension_semantics<parallel>], iteration_bounds = array<i64: 1>, scalar_prefetch = 0 : i64, scratch_operands = 2 : i64, tpu.core_type = #tpu.core_type<tc>, window_params = [{transform_indices = @transform_0, window_bounds = array<i64: 16, 128>}, {pipeline_mode = #tpu.pipeline_mode<synchronous>, transform_indices = @transform_1, window_bounds = array<i64: 16, 16>}, {pipeline_mode = #tpu.pipeline_mode<synchronous>, transform_indices = @transform_2, window_bounds = array<i64: 16, 16>}, {pipeline_mode = #tpu.pipeline_mode<synchronous>, transform_indices = @transform_3, window_bounds = array<i64: 16, 16>}, {transform_indices = @transform_4, window_bounds = array<i64: 16>}, {transform_indices = @transform_5, window_bounds = array<i64: 16>}, {transform_indices = @transform_6, window_bounds = array<i64: 16, 128>}, {transform_indices = @transform_7, window_bounds = array<i64: 16, 128>}]} {
    %c0 = arith.constant 0 : index
    %c0_0 = arith.constant 0 : index
    %0 = vector.load %arg2[%c0, %c0_0] : memref<16x16xf32, #tpu.memory_space<vmem>>, vector<16x16xf32>
    %c0_1 = arith.constant 0 : index
    %c0_2 = arith.constant 0 : index
    %1 = vector.load %arg1[%c0_1, %c0_2] : memref<16x128xf32, #tpu.memory_space<vmem>>, vector<16x128xf32>
    %cst = arith.constant dense<0.000000e+00> : vector<16x128xf32>
    %2 = tpu.matmul %0, %1, %cst {dimension_numbers = #tpu.dot_dimension_numbers<[1], [0], [0], [1], [0, 0, 1, 1], [], []>, precision = #tpu.contract_precision<fp32>} : vector<16x16xf32>, vector<16x128xf32>, vector<16x128xf32> -> vector<16x128xf32>
    %c0_3 = arith.constant 0 : index
    %c0_4 = arith.constant 0 : index
    %3 = vector.load %arg9[%c0_3, %c0_4] : memref<16x128xf32, #tpu.memory_space<vmem>>, vector<16x128xf32>
    tpu.vector_store %arg9[%c0_3, %c0_4], %2 {strides = array<i32>} : memref<16x128xf32, #tpu.memory_space<vmem>>, vector<16x128xf32>,
    %c0_5 = arith.constant 0 : index
    %c0_6 = arith.constant 0 : index
    %4 = vector.load %arg4[%c0_5, %c0_6] : memref<16x16xf32, #tpu.memory_space<vmem>>, vector<16x16xf32>
    %c0_7 = arith.constant 0 : index
    %c0_8 = arith.constant 0 : index
    %5 = vector.load %arg9[%c0_7, %c0_8] : memref<16x128xf32, #tpu.memory_space<vmem>>, vector<1x128xf32>
    %c0_9 = arith.constant 0 : index
    %6 = memref.load %arg5[%c0_9] : memref<16xf32, #tpu.memory_space<smem>>
    %7 = vector.broadcast %6 : f32 to vector<1x128xf32>
    %8 = arith.addf %5, %7 : vector<1x128xf32>
    %9 = math.tanh %8 : vector<1x128xf32>
    %10 = arith.mulf %9, %9 : vector<1x128xf32>
    %cst_10 = arith.constant 1.000000e+00 : f32
    %11 = vector.broadcast %cst_10 : f32 to vector<1x128xf32>
    %12 = arith.subf %11, %10 : vector<1x128xf32>
    %c0_11 = arith.constant 0 : index
    %13 = memref.load %arg6[%c0_11] : memref<16xf32, #tpu.memory_space<smem>>
    %14 = vector.broadcast %13 : f32 to vector<1x128xf32>
    %15 = arith.mulf %12, %14 : vector<1x128xf32>
    %cst_12 = arith.constant 1.000000e+00 : f32
    %16 = vector.broadcast %cst_12 : f32 to vector<1x128xf32>
    %17 = arith.addf %16, %15 : vector<1x128xf32>
    %18 = math.absf %17 : vector<1x128xf32>
    %cst_13 = arith.constant 9.99999971E-10 : f32
    %19 = vector.broadcast %cst_13 : f32 to vector<1x128xf32>
    %20 = arith.addf %18, %19 : vector<1x128xf32>
    %21 = math.log %20 : vector<1x128xf32>
    %c0_14 = arith.constant 0 : index
    %c0_15 = arith.constant 0 : index
    %22 = vector.load %arg8[%c0_14, %c0_15] : memref<16x128xf32, #tpu.memory_space<vmem>>, vector<1x128xf32>
    tpu.vector_store %arg8[%c0_14, %c0_15], %21 {strides = array<i32>} : memref<16x128xf32, #tpu.memory_space<vmem>>, vector<1x128xf32>,
    %c0_16 = arith.constant 0 : index
    %c0_17 = arith.constant 0 : index
    %23 = vector.load %arg10[%c0_16, %c0_17] : memref<16x128xf32, #tpu.memory_space<vmem>>, vector<1x128xf32>
    tpu.vector_store %arg10[%c0_16, %c0_17], %9 {strides = array<i32>} : memref<16x128xf32, #tpu.memory_space<vmem>>, vector<1x128xf32>,
    %c0_18 = arith.constant 0 : index
    %c0_19 = arith.constant 0 : index
    %24 = vector.load %arg9[%c0_18, %c0_19] : memref<16x128xf32, #tpu.memory_space<vmem>>, vector<16x128xf32>
    %25 = vector.extract_strided_slice %4 {offsets = [0, 0], sizes = [16, 1], strides = [1, 1]} : vector<16x16xf32> to vector<16x1xf32>
    %26 = vector.broadcast %25 : vector<16x1xf32> to vector<16x128xf32>
    %27 = vector.broadcast %9 : vector<1x128xf32> to vector<16x128xf32>
    %28 = arith.mulf %26, %27 : vector<16x128xf32>
    %29 = arith.addf %24, %28 : vector<16x128xf32>
    %c0_20 = arith.constant 0 : index
    %c0_21 = arith.constant 0 : index
    %30 = vector.load %arg9[%c0_20, %c0_21] : memref<16x128xf32, #tpu.memory_space<vmem>>, vector<16x128xf32>
    tpu.vector_store %arg9[%c0_20, %c0_21], %29 {strides = array<i32>} : memref<16x128xf32, #tpu.memory_space<vmem>>, vector<16x128xf32>,
    %c1 = arith.constant 1 : index
    %c0_22 = arith.constant 0 : index
    %31 = vector.load %arg9[%c1, %c0_22] : memref<16x128xf32, #tpu.memory_space<vmem>>, vector<1x128xf32>
    %c1_23 = arith.constant 1 : index
    %32 = memref.load %arg5[%c1_23] : memref<16xf32, #tpu.memory_space<smem>>
    %33 = vector.broadcast %32 : f32 to vector<1x128xf32>
    %34 = arith.addf %31, %33 : vector<1x128xf32>
    %35 = math.tanh %34 : vector<1x128xf32>
    %36 = arith.mulf %35, %35 : vector<1x128xf32>
    %cst_24 = arith.constant 1.000000e+00 : f32
    %37 = vector.broadcast %cst_24 : f32 to vector<1x128xf32>
    %38 = arith.subf %37, %36 : vector<1x128xf32>
    %c1_25 = arith.constant 1 : index
    %39 = memref.load %arg6[%c1_25] : memref<16xf32, #tpu.memory_space<smem>>
    %40 = vector.broadcast %39 : f32 to vector<1x128xf32>
    %41 = arith.mulf %38, %40 : vector<1x128xf32>
    %cst_26 = arith.constant 1.000000e+00 : f32
    %42 = vector.broadcast %cst_26 : f32 to vector<1x128xf32>
    %43 = arith.addf %42, %41 : vector<1x128xf32>
    %44 = math.absf %43 : vector<1x128xf32>
    %cst_27 = arith.constant 9.99999971E-10 : f32
    %45 = vector.broadcast %cst_27 : f32 to vector<1x128xf32>
    %46 = arith.addf %44, %45 : vector<1x128xf32>
    %47 = math.log %46 : vector<1x128xf32>
    %c1_28 = arith.constant 1 : index
    %c0_29 = arith.constant 0 : index
    %48 = vector.load %arg8[%c1_28, %c0_29] : memref<16x128xf32, #tpu.memory_space<vmem>>, vector<1x128xf32>
    tpu.vector_store %arg8[%c1_28, %c0_29], %47 {strides = array<i32>} : memref<16x128xf32, #tpu.memory_space<vmem>>, vector<1x128xf32>,
    %c1_30 = arith.constant 1 : index
    %c0_31 = arith.constant 0 : index
    %49 = vector.load %arg10[%c1_30, %c0_31] : memref<16x128xf32, #tpu.memory_space<vmem>>, vector<1x128xf32>
    tpu.vector_store %arg10[%c1_30, %c0_31], %35 {strides = array<i32>} : memref<16x128xf32, #tpu.memory_space<vmem>>, vector<1x128xf32>,
    %c0_32 = arith.constant 0 : index
    %c0_33 = arith.constant 0 : index
    %50 = vector.load %arg9[%c0_32, %c0_33] : memref<16x128xf32, #tpu.memory_space<vmem>>, vector<16x128xf32>
    %51 = vector.extract_strided_slice %4 {offsets = [0, 1], sizes = [16, 1], strides = [1, 1]} : vector<16x16xf32> to vector<16x1xf32>
    %52 = vector.broadcast %51 : vector<16x1xf32> to vector<16x128xf32>
    %53 = vector.broadcast %35 : vector<1x128xf32> to vector<16x128xf32>
    %54 = arith.mulf %52, %53 : vector<16x128xf32>
    %55 = arith.addf %50, %54 : vector<16x128xf32>
    %c0_34 = arith.constant 0 : index
    %c0_35 = arith.constant 0 : index
    %56 = vector.load %arg9[%c0_34, %c0_35] : memref<16x128xf32, #tpu.memory_space<vmem>>, vector<16x128xf32>
    tpu.vector_store %arg9[%c0_34, %c0_35], %55 {strides = array<i32>} : memref<16x128xf32, #tpu.memory_space<vmem>>, vector<16x128xf32>,
    %c2 = arith.constant 2 : index
    %c0_36 = arith.constant 0 : index
    %57 = vector.load %arg9[%c2, %c0_36] : memref<16x128xf32, #tpu.memory_space<vmem>>, vector<1x128xf32>
    %c2_37 = arith.constant 2 : index
    %58 = memref.load %arg5[%c2_37] : memref<16xf32, #tpu.memory_space<smem>>
    %59 = vector.broadcast %58 : f32 to vector<1x128xf32>
    %60 = arith.addf %57, %59 : vector<1x128xf32>
    %61 = math.tanh %60 : vector<1x128xf32>
    %62 = arith.mulf %61, %61 : vector<1x128xf32>
    %cst_38 = arith.constant 1.000000e+00 : f32
    %63 = vector.broadcast %cst_38 : f32 to vector<1x128xf32>
    %64 = arith.subf %63, %62 : vector<1x128xf32>
    %c2_39 = arith.constant 2 : index
    %65 = memref.load %arg6[%c2_39] : memref<16xf32, #tpu.memory_space<smem>>
    %66 = vector.broadcast %65 : f32 to vector<1x128xf32>
    %67 = arith.mulf %64, %66 : vector<1x128xf32>
    %cst_40 = arith.constant 1.000000e+00 : f32
    %68 = vector.broadcast %cst_40 : f32 to vector<1x128xf32>
    %69 = arith.addf %68, %67 : vector<1x128xf32>
    %70 = math.absf %69 : vector<1x128xf32>
    %cst_41 = arith.constant 9.99999971E-10 : f32
    %71 = vector.broadcast %cst_41 : f32 to vector<1x128xf32>
    %72 = arith.addf %70, %71 : vector<1x128xf32>
    %73 = math.log %72 : vector<1x128xf32>
    %c2_42 = arith.constant 2 : index
    %c0_43 = arith.constant 0 : index
    %74 = vector.load %arg8[%c2_42, %c0_43] : memref<16x128xf32, #tpu.memory_space<vmem>>, vector<1x128xf32>
    tpu.vector_store %arg8[%c2_42, %c0_43], %73 {strides = array<i32>} : memref<16x128xf32, #tpu.memory_space<vmem>>, vector<1x128xf32>,
    %c2_44 = arith.constant 2 : index
    %c0_45 = arith.constant 0 : index
    %75 = vector.load %arg10[%c2_44, %c0_45] : memref<16x128xf32, #tpu.memory_space<vmem>>, vector<1x128xf32>
    tpu.vector_store %arg10[%c2_44, %c0_45], %61 {strides = array<i32>} : memref<16x128xf32, #tpu.memory_space<vmem>>, vector<1x128xf32>,
    %c0_46 = arith.constant 0 : index
    %c0_47 = arith.constant 0 : index
    %76 = vector.load %arg9[%c0_46, %c0_47] : memref<16x128xf32, #tpu.memory_space<vmem>>, vector<16x128xf32>
    %77 = vector.extract_strided_slice %4 {offsets = [0, 2], sizes = [16, 1], strides = [1, 1]} : vector<16x16xf32> to vector<16x1xf32>
    %78 = vector.broadcast %77 : vector<16x1xf32> to vector<16x128xf32>
    %79 = vector.broadcast %61 : vector<1x128xf32> to vector<16x128xf32>
    %80 = arith.mulf %78, %79 : vector<16x128xf32>
    %81 = arith.addf %76, %80 : vector<16x128xf32>
    %c0_48 = arith.constant 0 : index
    %c0_49 = arith.constant 0 : index
    %82 = vector.load %arg9[%c0_48, %c0_49] : memref<16x128xf32, #tpu.memory_space<vmem>>, vector<16x128xf32>
    tpu.vector_store %arg9[%c0_48, %c0_49], %81 {strides = array<i32>} : memref<16x128xf32, #tpu.memory_space<vmem>>, vector<16x128xf32>,
    %c3 = arith.constant 3 : index
    %c0_50 = arith.constant 0 : index
    %83 = vector.load %arg9[%c3, %c0_50] : memref<16x128xf32, #tpu.memory_space<vmem>>, vector<1x128xf32>
    %c3_51 = arith.constant 3 : index
    %84 = memref.load %arg5[%c3_51] : memref<16xf32, #tpu.memory_space<smem>>
    %85 = vector.broadcast %84 : f32 to vector<1x128xf32>
    %86 = arith.addf %83, %85 : vector<1x128xf32>
    %87 = math.tanh %86 : vector<1x128xf32>
    %88 = arith.mulf %87, %87 : vector<1x128xf32>
    %cst_52 = arith.constant 1.000000e+00 : f32
    %89 = vector.broadcast %cst_52 : f32 to vector<1x128xf32>
    %90 = arith.subf %89, %88 : vector<1x128xf32>
    %c3_53 = arith.constant 3 : index
    %91 = memref.load %arg6[%c3_53] : memref<16xf32, #tpu.memory_space<smem>>
    %92 = vector.broadcast %91 : f32 to vector<1x128xf32>
    %93 = arith.mulf %90, %92 : vector<1x128xf32>
    %cst_54 = arith.constant 1.000000e+00 : f32
    %94 = vector.broadcast %cst_54 : f32 to vector<1x128xf32>
    %95 = arith.addf %94, %93 : vector<1x128xf32>
    %96 = math.absf %95 : vector<1x128xf32>
    %cst_55 = arith.constant 9.99999971E-10 : f32
    %97 = vector.broadcast %cst_55 : f32 to vector<1x128xf32>
    %98 = arith.addf %96, %97 : vector<1x128xf32>
    %99 = math.log %98 : vector<1x128xf32>
    %c3_56 = arith.constant 3 : index
    %c0_57 = arith.constant 0 : index
    %100 = vector.load %arg8[%c3_56, %c0_57] : memref<16x128xf32, #tpu.memory_space<vmem>>, vector<1x128xf32>
    tpu.vector_store %arg8[%c3_56, %c0_57], %99 {strides = array<i32>} : memref<16x128xf32, #tpu.memory_space<vmem>>, vector<1x128xf32>,
    %c3_58 = arith.constant 3 : index
    %c0_59 = arith.constant 0 : index
    %101 = vector.load %arg10[%c3_58, %c0_59] : memref<16x128xf32, #tpu.memory_space<vmem>>, vector<1x128xf32>
    tpu.vector_store %arg10[%c3_58, %c0_59], %87 {strides = array<i32>} : memref<16x128xf32, #tpu.memory_space<vmem>>, vector<1x128xf32>,
    %c0_60 = arith.constant 0 : index
    %c0_61 = arith.constant 0 : index
    %102 = vector.load %arg9[%c0_60, %c0_61] : memref<16x128xf32, #tpu.memory_space<vmem>>, vector<16x128xf32>
    %103 = vector.extract_strided_slice %4 {offsets = [0, 3], sizes = [16, 1], strides = [1, 1]} : vector<16x16xf32> to vector<16x1xf32>
    %104 = vector.broadcast %103 : vector<16x1xf32> to vector<16x128xf32>
    %105 = vector.broadcast %87 : vector<1x128xf32> to vector<16x128xf32>
    %106 = arith.mulf %104, %105 : vector<16x128xf32>
    %107 = arith.addf %102, %106 : vector<16x128xf32>
    %c0_62 = arith.constant 0 : index
    %c0_63 = arith.constant 0 : index
    %108 = vector.load %arg9[%c0_62, %c0_63] : memref<16x128xf32, #tpu.memory_space<vmem>>, vector<16x128xf32>
    tpu.vector_store %arg9[%c0_62, %c0_63], %107 {strides = array<i32>} : memref<16x128xf32, #tpu.memory_space<vmem>>, vector<16x128xf32>,
    %c4 = arith.constant 4 : index
    %c0_64 = arith.constant 0 : index
    %109 = vector.load %arg9[%c4, %c0_64] : memref<16x128xf32, #tpu.memory_space<vmem>>, vector<1x128xf32>
    %c4_65 = arith.constant 4 : index
    %110 = memref.load %arg5[%c4_65] : memref<16xf32, #tpu.memory_space<smem>>
    %111 = vector.broadcast %110 : f32 to vector<1x128xf32>
    %112 = arith.addf %109, %111 : vector<1x128xf32>
    %113 = math.tanh %112 : vector<1x128xf32>
    %114 = arith.mulf %113, %113 : vector<1x128xf32>
    %cst_66 = arith.constant 1.000000e+00 : f32
    %115 = vector.broadcast %cst_66 : f32 to vector<1x128xf32>
    %116 = arith.subf %115, %114 : vector<1x128xf32>
    %c4_67 = arith.constant 4 : index
    %117 = memref.load %arg6[%c4_67] : memref<16xf32, #tpu.memory_space<smem>>
    %118 = vector.broadcast %117 : f32 to vector<1x128xf32>
    %119 = arith.mulf %116, %118 : vector<1x128xf32>
    %cst_68 = arith.constant 1.000000e+00 : f32
    %120 = vector.broadcast %cst_68 : f32 to vector<1x128xf32>
    %121 = arith.addf %120, %119 : vector<1x128xf32>
    %122 = math.absf %121 : vector<1x128xf32>
    %cst_69 = arith.constant 9.99999971E-10 : f32
    %123 = vector.broadcast %cst_69 : f32 to vector<1x128xf32>
    %124 = arith.addf %122, %123 : vector<1x128xf32>
    %125 = math.log %124 : vector<1x128xf32>
    %c4_70 = arith.constant 4 : index
    %c0_71 = arith.constant 0 : index
    %126 = vector.load %arg8[%c4_70, %c0_71] : memref<16x128xf32, #tpu.memory_space<vmem>>, vector<1x128xf32>
    tpu.vector_store %arg8[%c4_70, %c0_71], %125 {strides = array<i32>} : memref<16x128xf32, #tpu.memory_space<vmem>>, vector<1x128xf32>,
    %c4_72 = arith.constant 4 : index
    %c0_73 = arith.constant 0 : index
    %127 = vector.load %arg10[%c4_72, %c0_73] : memref<16x128xf32, #tpu.memory_space<vmem>>, vector<1x128xf32>
    tpu.vector_store %arg10[%c4_72, %c0_73], %113 {strides = array<i32>} : memref<16x128xf32, #tpu.memory_space<vmem>>, vector<1x128xf32>,
    %c0_74 = arith.constant 0 : index
    %c0_75 = arith.constant 0 : index
    %128 = vector.load %arg9[%c0_74, %c0_75] : memref<16x128xf32, #tpu.memory_space<vmem>>, vector<16x128xf32>
    %129 = vector.extract_strided_slice %4 {offsets = [0, 4], sizes = [16, 1], strides = [1, 1]} : vector<16x16xf32> to vector<16x1xf32>
    %130 = vector.broadcast %129 : vector<16x1xf32> to vector<16x128xf32>
    %131 = vector.broadcast %113 : vector<1x128xf32> to vector<16x128xf32>
    %132 = arith.mulf %130, %131 : vector<16x128xf32>
    %133 = arith.addf %128, %132 : vector<16x128xf32>
    %c0_76 = arith.constant 0 : index
    %c0_77 = arith.constant 0 : index
    %134 = vector.load %arg9[%c0_76, %c0_77] : memref<16x128xf32, #tpu.memory_space<vmem>>, vector<16x128xf32>
    tpu.vector_store %arg9[%c0_76, %c0_77], %133 {strides = array<i32>} : memref<16x128xf32, #tpu.memory_space<vmem>>, vector<16x128xf32>,
    %c5 = arith.constant 5 : index
    %c0_78 = arith.constant 0 : index
    %135 = vector.load %arg9[%c5, %c0_78] : memref<16x128xf32, #tpu.memory_space<vmem>>, vector<1x128xf32>
    %c5_79 = arith.constant 5 : index
    %136 = memref.load %arg5[%c5_79] : memref<16xf32, #tpu.memory_space<smem>>
    %137 = vector.broadcast %136 : f32 to vector<1x128xf32>
    %138 = arith.addf %135, %137 : vector<1x128xf32>
    %139 = math.tanh %138 : vector<1x128xf32>
    %140 = arith.mulf %139, %139 : vector<1x128xf32>
    %cst_80 = arith.constant 1.000000e+00 : f32
    %141 = vector.broadcast %cst_80 : f32 to vector<1x128xf32>
    %142 = arith.subf %141, %140 : vector<1x128xf32>
    %c5_81 = arith.constant 5 : index
    %143 = memref.load %arg6[%c5_81] : memref<16xf32, #tpu.memory_space<smem>>
    %144 = vector.broadcast %143 : f32 to vector<1x128xf32>
    %145 = arith.mulf %142, %144 : vector<1x128xf32>
    %cst_82 = arith.constant 1.000000e+00 : f32
    %146 = vector.broadcast %cst_82 : f32 to vector<1x128xf32>
    %147 = arith.addf %146, %145 : vector<1x128xf32>
    %148 = math.absf %147 : vector<1x128xf32>
    %cst_83 = arith.constant 9.99999971E-10 : f32
    %149 = vector.broadcast %cst_83 : f32 to vector<1x128xf32>
    %150 = arith.addf %148, %149 : vector<1x128xf32>
    %151 = math.log %150 : vector<1x128xf32>
    %c5_84 = arith.constant 5 : index
    %c0_85 = arith.constant 0 : index
    %152 = vector.load %arg8[%c5_84, %c0_85] : memref<16x128xf32, #tpu.memory_space<vmem>>, vector<1x128xf32>
    tpu.vector_store %arg8[%c5_84, %c0_85], %151 {strides = array<i32>} : memref<16x128xf32, #tpu.memory_space<vmem>>, vector<1x128xf32>,
    %c5_86 = arith.constant 5 : index
    %c0_87 = arith.constant 0 : index
    %153 = vector.load %arg10[%c5_86, %c0_87] : memref<16x128xf32, #tpu.memory_space<vmem>>, vector<1x128xf32>
    tpu.vector_store %arg10[%c5_86, %c0_87], %139 {strides = array<i32>} : memref<16x128xf32, #tpu.memory_space<vmem>>, vector<1x128xf32>,
    %c0_88 = arith.constant 0 : index
    %c0_89 = arith.constant 0 : index
    %154 = vector.load %arg9[%c0_88, %c0_89] : memref<16x128xf32, #tpu.memory_space<vmem>>, vector<16x128xf32>
    %155 = vector.extract_strided_slice %4 {offsets = [0, 5], sizes = [16, 1], strides = [1, 1]} : vector<16x16xf32> to vector<16x1xf32>
    %156 = vector.broadcast %155 : vector<16x1xf32> to vector<16x128xf32>
    %157 = vector.broadcast %139 : vector<1x128xf32> to vector<16x128xf32>
    %158 = arith.mulf %156, %157 : vector<16x128xf32>
    %159 = arith.addf %154, %158 : vector<16x128xf32>
    %c0_90 = arith.constant 0 : index
    %c0_91 = arith.constant 0 : index
    %160 = vector.load %arg9[%c0_90, %c0_91] : memref<16x128xf32, #tpu.memory_space<vmem>>, vector<16x128xf32>
    tpu.vector_store %arg9[%c0_90, %c0_91], %159 {strides = array<i32>} : memref<16x128xf32, #tpu.memory_space<vmem>>, vector<16x128xf32>,
    %c6 = arith.constant 6 : index
    %c0_92 = arith.constant 0 : index
    %161 = vector.load %arg9[%c6, %c0_92] : memref<16x128xf32, #tpu.memory_space<vmem>>, vector<1x128xf32>
    %c6_93 = arith.constant 6 : index
    %162 = memref.load %arg5[%c6_93] : memref<16xf32, #tpu.memory_space<smem>>
    %163 = vector.broadcast %162 : f32 to vector<1x128xf32>
    %164 = arith.addf %161, %163 : vector<1x128xf32>
    %165 = math.tanh %164 : vector<1x128xf32>
    %166 = arith.mulf %165, %165 : vector<1x128xf32>
    %cst_94 = arith.constant 1.000000e+00 : f32
    %167 = vector.broadcast %cst_94 : f32 to vector<1x128xf32>
    %168 = arith.subf %167, %166 : vector<1x128xf32>
    %c6_95 = arith.constant 6 : index
    %169 = memref.load %arg6[%c6_95] : memref<16xf32, #tpu.memory_space<smem>>
    %170 = vector.broadcast %169 : f32 to vector<1x128xf32>
    %171 = arith.mulf %168, %170 : vector<1x128xf32>
    %cst_96 = arith.constant 1.000000e+00 : f32
    %172 = vector.broadcast %cst_96 : f32 to vector<1x128xf32>
    %173 = arith.addf %172, %171 : vector<1x128xf32>
    %174 = math.absf %173 : vector<1x128xf32>
    %cst_97 = arith.constant 9.99999971E-10 : f32
    %175 = vector.broadcast %cst_97 : f32 to vector<1x128xf32>
    %176 = arith.addf %174, %175 : vector<1x128xf32>
    %177 = math.log %176 : vector<1x128xf32>
    %c6_98 = arith.constant 6 : index
    %c0_99 = arith.constant 0 : index
    %178 = vector.load %arg8[%c6_98, %c0_99] : memref<16x128xf32, #tpu.memory_space<vmem>>, vector<1x128xf32>
    tpu.vector_store %arg8[%c6_98, %c0_99], %177 {strides = array<i32>} : memref<16x128xf32, #tpu.memory_space<vmem>>, vector<1x128xf32>,
    %c6_100 = arith.constant 6 : index
    %c0_101 = arith.constant 0 : index
    %179 = vector.load %arg10[%c6_100, %c0_101] : memref<16x128xf32, #tpu.memory_space<vmem>>, vector<1x128xf32>
    tpu.vector_store %arg10[%c6_100, %c0_101], %165 {strides = array<i32>} : memref<16x128xf32, #tpu.memory_space<vmem>>, vector<1x128xf32>,
    %c0_102 = arith.constant 0 : index
    %c0_103 = arith.constant 0 : index
    %180 = vector.load %arg9[%c0_102, %c0_103] : memref<16x128xf32, #tpu.memory_space<vmem>>, vector<16x128xf32>
    %181 = vector.extract_strided_slice %4 {offsets = [0, 6], sizes = [16, 1], strides = [1, 1]} : vector<16x16xf32> to vector<16x1xf32>
    %182 = vector.broadcast %181 : vector<16x1xf32> to vector<16x128xf32>
    %183 = vector.broadcast %165 : vector<1x128xf32> to vector<16x128xf32>
    %184 = arith.mulf %182, %183 : vector<16x128xf32>
    %185 = arith.addf %180, %184 : vector<16x128xf32>
    %c0_104 = arith.constant 0 : index
    %c0_105 = arith.constant 0 : index
    %186 = vector.load %arg9[%c0_104, %c0_105] : memref<16x128xf32, #tpu.memory_space<vmem>>, vector<16x128xf32>
    tpu.vector_store %arg9[%c0_104, %c0_105], %185 {strides = array<i32>} : memref<16x128xf32, #tpu.memory_space<vmem>>, vector<16x128xf32>,
    %c7 = arith.constant 7 : index
    %c0_106 = arith.constant 0 : index
    %187 = vector.load %arg9[%c7, %c0_106] : memref<16x128xf32, #tpu.memory_space<vmem>>, vector<1x128xf32>
    %c7_107 = arith.constant 7 : index
    %188 = memref.load %arg5[%c7_107] : memref<16xf32, #tpu.memory_space<smem>>
    %189 = vector.broadcast %188 : f32 to vector<1x128xf32>
    %190 = arith.addf %187, %189 : vector<1x128xf32>
    %191 = math.tanh %190 : vector<1x128xf32>
    %192 = arith.mulf %191, %191 : vector<1x128xf32>
    %cst_108 = arith.constant 1.000000e+00 : f32
    %193 = vector.broadcast %cst_108 : f32 to vector<1x128xf32>
    %194 = arith.subf %193, %192 : vector<1x128xf32>
    %c7_109 = arith.constant 7 : index
    %195 = memref.load %arg6[%c7_109] : memref<16xf32, #tpu.memory_space<smem>>
    %196 = vector.broadcast %195 : f32 to vector<1x128xf32>
    %197 = arith.mulf %194, %196 : vector<1x128xf32>
    %cst_110 = arith.constant 1.000000e+00 : f32
    %198 = vector.broadcast %cst_110 : f32 to vector<1x128xf32>
    %199 = arith.addf %198, %197 : vector<1x128xf32>
    %200 = math.absf %199 : vector<1x128xf32>
    %cst_111 = arith.constant 9.99999971E-10 : f32
    %201 = vector.broadcast %cst_111 : f32 to vector<1x128xf32>
    %202 = arith.addf %200, %201 : vector<1x128xf32>
    %203 = math.log %202 : vector<1x128xf32>
    %c7_112 = arith.constant 7 : index
    %c0_113 = arith.constant 0 : index
    %204 = vector.load %arg8[%c7_112, %c0_113] : memref<16x128xf32, #tpu.memory_space<vmem>>, vector<1x128xf32>
    tpu.vector_store %arg8[%c7_112, %c0_113], %203 {strides = array<i32>} : memref<16x128xf32, #tpu.memory_space<vmem>>, vector<1x128xf32>,
    %c7_114 = arith.constant 7 : index
    %c0_115 = arith.constant 0 : index
    %205 = vector.load %arg10[%c7_114, %c0_115] : memref<16x128xf32, #tpu.memory_space<vmem>>, vector<1x128xf32>
    tpu.vector_store %arg10[%c7_114, %c0_115], %191 {strides = array<i32>} : memref<16x128xf32, #tpu.memory_space<vmem>>, vector<1x128xf32>,
    %c0_116 = arith.constant 0 : index
    %c0_117 = arith.constant 0 : index
    %206 = vector.load %arg9[%c0_116, %c0_117] : memref<16x128xf32, #tpu.memory_space<vmem>>, vector<16x128xf32>
    %207 = vector.extract_strided_slice %4 {offsets = [0, 7], sizes = [16, 1], strides = [1, 1]} : vector<16x16xf32> to vector<16x1xf32>
    %208 = vector.broadcast %207 : vector<16x1xf32> to vector<16x128xf32>
    %209 = vector.broadcast %191 : vector<1x128xf32> to vector<16x128xf32>
    %210 = arith.mulf %208, %209 : vector<16x128xf32>
    %211 = arith.addf %206, %210 : vector<16x128xf32>
    %c0_118 = arith.constant 0 : index
    %c0_119 = arith.constant 0 : index
    %212 = vector.load %arg9[%c0_118, %c0_119] : memref<16x128xf32, #tpu.memory_space<vmem>>, vector<16x128xf32>
    tpu.vector_store %arg9[%c0_118, %c0_119], %211 {strides = array<i32>} : memref<16x128xf32, #tpu.memory_space<vmem>>, vector<16x128xf32>,
    %c8 = arith.constant 8 : index
    %c0_120 = arith.constant 0 : index
    %213 = vector.load %arg9[%c8, %c0_120] : memref<16x128xf32, #tpu.memory_space<vmem>>, vector<1x128xf32>
    %c8_121 = arith.constant 8 : index
    %214 = memref.load %arg5[%c8_121] : memref<16xf32, #tpu.memory_space<smem>>
    %215 = vector.broadcast %214 : f32 to vector<1x128xf32>
    %216 = arith.addf %213, %215 : vector<1x128xf32>
    %217 = math.tanh %216 : vector<1x128xf32>
    %218 = arith.mulf %217, %217 : vector<1x128xf32>
    %cst_122 = arith.constant 1.000000e+00 : f32
    %219 = vector.broadcast %cst_122 : f32 to vector<1x128xf32>
    %220 = arith.subf %219, %218 : vector<1x128xf32>
    %c8_123 = arith.constant 8 : index
    %221 = memref.load %arg6[%c8_123] : memref<16xf32, #tpu.memory_space<smem>>
    %222 = vector.broadcast %221 : f32 to vector<1x128xf32>
    %223 = arith.mulf %220, %222 : vector<1x128xf32>
    %cst_124 = arith.constant 1.000000e+00 : f32
    %224 = vector.broadcast %cst_124 : f32 to vector<1x128xf32>
    %225 = arith.addf %224, %223 : vector<1x128xf32>
    %226 = math.absf %225 : vector<1x128xf32>
    %cst_125 = arith.constant 9.99999971E-10 : f32
    %227 = vector.broadcast %cst_125 : f32 to vector<1x128xf32>
    %228 = arith.addf %226, %227 : vector<1x128xf32>
    %229 = math.log %228 : vector<1x128xf32>
    %c8_126 = arith.constant 8 : index
    %c0_127 = arith.constant 0 : index
    %230 = vector.load %arg8[%c8_126, %c0_127] : memref<16x128xf32, #tpu.memory_space<vmem>>, vector<1x128xf32>
    tpu.vector_store %arg8[%c8_126, %c0_127], %229 {strides = array<i32>} : memref<16x128xf32, #tpu.memory_space<vmem>>, vector<1x128xf32>,
    %c8_128 = arith.constant 8 : index
    %c0_129 = arith.constant 0 : index
    %231 = vector.load %arg10[%c8_128, %c0_129] : memref<16x128xf32, #tpu.memory_space<vmem>>, vector<1x128xf32>
    tpu.vector_store %arg10[%c8_128, %c0_129], %217 {strides = array<i32>} : memref<16x128xf32, #tpu.memory_space<vmem>>, vector<1x128xf32>,
    %c0_130 = arith.constant 0 : index
    %c0_131 = arith.constant 0 : index
    %232 = vector.load %arg9[%c0_130, %c0_131] : memref<16x128xf32, #tpu.memory_space<vmem>>, vector<16x128xf32>
    %233 = vector.extract_strided_slice %4 {offsets = [0, 8], sizes = [16, 1], strides = [1, 1]} : vector<16x16xf32> to vector<16x1xf32>
    %234 = vector.broadcast %233 : vector<16x1xf32> to vector<16x128xf32>
    %235 = vector.broadcast %217 : vector<1x128xf32> to vector<16x128xf32>
    %236 = arith.mulf %234, %235 : vector<16x128xf32>
    %237 = arith.addf %232, %236 : vector<16x128xf32>
    %c0_132 = arith.constant 0 : index
    %c0_133 = arith.constant 0 : index
    %238 = vector.load %arg9[%c0_132, %c0_133] : memref<16x128xf32, #tpu.memory_space<vmem>>, vector<16x128xf32>
    tpu.vector_store %arg9[%c0_132, %c0_133], %237 {strides = array<i32>} : memref<16x128xf32, #tpu.memory_space<vmem>>, vector<16x128xf32>,
    %c9 = arith.constant 9 : index
    %c0_134 = arith.constant 0 : index
    %239 = vector.load %arg9[%c9, %c0_134] : memref<16x128xf32, #tpu.memory_space<vmem>>, vector<1x128xf32>
    %c9_135 = arith.constant 9 : index
    %240 = memref.load %arg5[%c9_135] : memref<16xf32, #tpu.memory_space<smem>>
    %241 = vector.broadcast %240 : f32 to vector<1x128xf32>
    %242 = arith.addf %239, %241 : vector<1x128xf32>
    %243 = math.tanh %242 : vector<1x128xf32>
    %244 = arith.mulf %243, %243 : vector<1x128xf32>
    %cst_136 = arith.constant 1.000000e+00 : f32
    %245 = vector.broadcast %cst_136 : f32 to vector<1x128xf32>
    %246 = arith.subf %245, %244 : vector<1x128xf32>
    %c9_137 = arith.constant 9 : index
    %247 = memref.load %arg6[%c9_137] : memref<16xf32, #tpu.memory_space<smem>>
    %248 = vector.broadcast %247 : f32 to vector<1x128xf32>
    %249 = arith.mulf %246, %248 : vector<1x128xf32>
    %cst_138 = arith.constant 1.000000e+00 : f32
    %250 = vector.broadcast %cst_138 : f32 to vector<1x128xf32>
    %251 = arith.addf %250, %249 : vector<1x128xf32>
    %252 = math.absf %251 : vector<1x128xf32>
    %cst_139 = arith.constant 9.99999971E-10 : f32
    %253 = vector.broadcast %cst_139 : f32 to vector<1x128xf32>
    %254 = arith.addf %252, %253 : vector<1x128xf32>
    %255 = math.log %254 : vector<1x128xf32>
    %c9_140 = arith.constant 9 : index
    %c0_141 = arith.constant 0 : index
    %256 = vector.load %arg8[%c9_140, %c0_141] : memref<16x128xf32, #tpu.memory_space<vmem>>, vector<1x128xf32>
    tpu.vector_store %arg8[%c9_140, %c0_141], %255 {strides = array<i32>} : memref<16x128xf32, #tpu.memory_space<vmem>>, vector<1x128xf32>,
    %c9_142 = arith.constant 9 : index
    %c0_143 = arith.constant 0 : index
    %257 = vector.load %arg10[%c9_142, %c0_143] : memref<16x128xf32, #tpu.memory_space<vmem>>, vector<1x128xf32>
    tpu.vector_store %arg10[%c9_142, %c0_143], %243 {strides = array<i32>} : memref<16x128xf32, #tpu.memory_space<vmem>>, vector<1x128xf32>,
    %c0_144 = arith.constant 0 : index
    %c0_145 = arith.constant 0 : index
    %258 = vector.load %arg9[%c0_144, %c0_145] : memref<16x128xf32, #tpu.memory_space<vmem>>, vector<16x128xf32>
    %259 = vector.extract_strided_slice %4 {offsets = [0, 9], sizes = [16, 1], strides = [1, 1]} : vector<16x16xf32> to vector<16x1xf32>
    %260 = vector.broadcast %259 : vector<16x1xf32> to vector<16x128xf32>
    %261 = vector.broadcast %243 : vector<1x128xf32> to vector<16x128xf32>
    %262 = arith.mulf %260, %261 : vector<16x128xf32>
    %263 = arith.addf %258, %262 : vector<16x128xf32>
    %c0_146 = arith.constant 0 : index
    %c0_147 = arith.constant 0 : index
    %264 = vector.load %arg9[%c0_146, %c0_147] : memref<16x128xf32, #tpu.memory_space<vmem>>, vector<16x128xf32>
    tpu.vector_store %arg9[%c0_146, %c0_147], %263 {strides = array<i32>} : memref<16x128xf32, #tpu.memory_space<vmem>>, vector<16x128xf32>,
    %c10 = arith.constant 10 : index
    %c0_148 = arith.constant 0 : index
    %265 = vector.load %arg9[%c10, %c0_148] : memref<16x128xf32, #tpu.memory_space<vmem>>, vector<1x128xf32>
    %c10_149 = arith.constant 10 : index
    %266 = memref.load %arg5[%c10_149] : memref<16xf32, #tpu.memory_space<smem>>
    %267 = vector.broadcast %266 : f32 to vector<1x128xf32>
    %268 = arith.addf %265, %267 : vector<1x128xf32>
    %269 = math.tanh %268 : vector<1x128xf32>
    %270 = arith.mulf %269, %269 : vector<1x128xf32>
    %cst_150 = arith.constant 1.000000e+00 : f32
    %271 = vector.broadcast %cst_150 : f32 to vector<1x128xf32>
    %272 = arith.subf %271, %270 : vector<1x128xf32>
    %c10_151 = arith.constant 10 : index
    %273 = memref.load %arg6[%c10_151] : memref<16xf32, #tpu.memory_space<smem>>
    %274 = vector.broadcast %273 : f32 to vector<1x128xf32>
    %275 = arith.mulf %272, %274 : vector<1x128xf32>
    %cst_152 = arith.constant 1.000000e+00 : f32
    %276 = vector.broadcast %cst_152 : f32 to vector<1x128xf32>
    %277 = arith.addf %276, %275 : vector<1x128xf32>
    %278 = math.absf %277 : vector<1x128xf32>
    %cst_153 = arith.constant 9.99999971E-10 : f32
    %279 = vector.broadcast %cst_153 : f32 to vector<1x128xf32>
    %280 = arith.addf %278, %279 : vector<1x128xf32>
    %281 = math.log %280 : vector<1x128xf32>
    %c10_154 = arith.constant 10 : index
    %c0_155 = arith.constant 0 : index
    %282 = vector.load %arg8[%c10_154, %c0_155] : memref<16x128xf32, #tpu.memory_space<vmem>>, vector<1x128xf32>
    tpu.vector_store %arg8[%c10_154, %c0_155], %281 {strides = array<i32>} : memref<16x128xf32, #tpu.memory_space<vmem>>, vector<1x128xf32>,
    %c10_156 = arith.constant 10 : index
    %c0_157 = arith.constant 0 : index
    %283 = vector.load %arg10[%c10_156, %c0_157] : memref<16x128xf32, #tpu.memory_space<vmem>>, vector<1x128xf32>
    tpu.vector_store %arg10[%c10_156, %c0_157], %269 {strides = array<i32>} : memref<16x128xf32, #tpu.memory_space<vmem>>, vector<1x128xf32>,
    %c0_158 = arith.constant 0 : index
    %c0_159 = arith.constant 0 : index
    %284 = vector.load %arg9[%c0_158, %c0_159] : memref<16x128xf32, #tpu.memory_space<vmem>>, vector<16x128xf32>
    %285 = vector.extract_strided_slice %4 {offsets = [0, 10], sizes = [16, 1], strides = [1, 1]} : vector<16x16xf32> to vector<16x1xf32>
    %286 = vector.broadcast %285 : vector<16x1xf32> to vector<16x128xf32>
    %287 = vector.broadcast %269 : vector<1x128xf32> to vector<16x128xf32>
    %288 = arith.mulf %286, %287 : vector<16x128xf32>
    %289 = arith.addf %284, %288 : vector<16x128xf32>
    %c0_160 = arith.constant 0 : index
    %c0_161 = arith.constant 0 : index
    %290 = vector.load %arg9[%c0_160, %c0_161] : memref<16x128xf32, #tpu.memory_space<vmem>>, vector<16x128xf32>
    tpu.vector_store %arg9[%c0_160, %c0_161], %289 {strides = array<i32>} : memref<16x128xf32, #tpu.memory_space<vmem>>, vector<16x128xf32>,
    %c11 = arith.constant 11 : index
    %c0_162 = arith.constant 0 : index
    %291 = vector.load %arg9[%c11, %c0_162] : memref<16x128xf32, #tpu.memory_space<vmem>>, vector<1x128xf32>
    %c11_163 = arith.constant 11 : index
    %292 = memref.load %arg5[%c11_163] : memref<16xf32, #tpu.memory_space<smem>>
    %293 = vector.broadcast %292 : f32 to vector<1x128xf32>
    %294 = arith.addf %291, %293 : vector<1x128xf32>
    %295 = math.tanh %294 : vector<1x128xf32>
    %296 = arith.mulf %295, %295 : vector<1x128xf32>
    %cst_164 = arith.constant 1.000000e+00 : f32
    %297 = vector.broadcast %cst_164 : f32 to vector<1x128xf32>
    %298 = arith.subf %297, %296 : vector<1x128xf32>
    %c11_165 = arith.constant 11 : index
    %299 = memref.load %arg6[%c11_165] : memref<16xf32, #tpu.memory_space<smem>>
    %300 = vector.broadcast %299 : f32 to vector<1x128xf32>
    %301 = arith.mulf %298, %300 : vector<1x128xf32>
    %cst_166 = arith.constant 1.000000e+00 : f32
    %302 = vector.broadcast %cst_166 : f32 to vector<1x128xf32>
    %303 = arith.addf %302, %301 : vector<1x128xf32>
    %304 = math.absf %303 : vector<1x128xf32>
    %cst_167 = arith.constant 9.99999971E-10 : f32
    %305 = vector.broadcast %cst_167 : f32 to vector<1x128xf32>
    %306 = arith.addf %304, %305 : vector<1x128xf32>
    %307 = math.log %306 : vector<1x128xf32>
    %c11_168 = arith.constant 11 : index
    %c0_169 = arith.constant 0 : index
    %308 = vector.load %arg8[%c11_168, %c0_169] : memref<16x128xf32, #tpu.memory_space<vmem>>, vector<1x128xf32>
    tpu.vector_store %arg8[%c11_168, %c0_169], %307 {strides = array<i32>} : memref<16x128xf32, #tpu.memory_space<vmem>>, vector<1x128xf32>,
    %c11_170 = arith.constant 11 : index
    %c0_171 = arith.constant 0 : index
    %309 = vector.load %arg10[%c11_170, %c0_171] : memref<16x128xf32, #tpu.memory_space<vmem>>, vector<1x128xf32>
    tpu.vector_store %arg10[%c11_170, %c0_171], %295 {strides = array<i32>} : memref<16x128xf32, #tpu.memory_space<vmem>>, vector<1x128xf32>,
    %c0_172 = arith.constant 0 : index
    %c0_173 = arith.constant 0 : index
    %310 = vector.load %arg9[%c0_172, %c0_173] : memref<16x128xf32, #tpu.memory_space<vmem>>, vector<16x128xf32>
    %311 = vector.extract_strided_slice %4 {offsets = [0, 11], sizes = [16, 1], strides = [1, 1]} : vector<16x16xf32> to vector<16x1xf32>
    %312 = vector.broadcast %311 : vector<16x1xf32> to vector<16x128xf32>
    %313 = vector.broadcast %295 : vector<1x128xf32> to vector<16x128xf32>
    %314 = arith.mulf %312, %313 : vector<16x128xf32>
    %315 = arith.addf %310, %314 : vector<16x128xf32>
    %c0_174 = arith.constant 0 : index
    %c0_175 = arith.constant 0 : index
    %316 = vector.load %arg9[%c0_174, %c0_175] : memref<16x128xf32, #tpu.memory_space<vmem>>, vector<16x128xf32>
    tpu.vector_store %arg9[%c0_174, %c0_175], %315 {strides = array<i32>} : memref<16x128xf32, #tpu.memory_space<vmem>>, vector<16x128xf32>,
    %c12 = arith.constant 12 : index
    %c0_176 = arith.constant 0 : index
    %317 = vector.load %arg9[%c12, %c0_176] : memref<16x128xf32, #tpu.memory_space<vmem>>, vector<1x128xf32>
    %c12_177 = arith.constant 12 : index
    %318 = memref.load %arg5[%c12_177] : memref<16xf32, #tpu.memory_space<smem>>
    %319 = vector.broadcast %318 : f32 to vector<1x128xf32>
    %320 = arith.addf %317, %319 : vector<1x128xf32>
    %321 = math.tanh %320 : vector<1x128xf32>
    %322 = arith.mulf %321, %321 : vector<1x128xf32>
    %cst_178 = arith.constant 1.000000e+00 : f32
    %323 = vector.broadcast %cst_178 : f32 to vector<1x128xf32>
    %324 = arith.subf %323, %322 : vector<1x128xf32>
    %c12_179 = arith.constant 12 : index
    %325 = memref.load %arg6[%c12_179] : memref<16xf32, #tpu.memory_space<smem>>
    %326 = vector.broadcast %325 : f32 to vector<1x128xf32>
    %327 = arith.mulf %324, %326 : vector<1x128xf32>
    %cst_180 = arith.constant 1.000000e+00 : f32
    %328 = vector.broadcast %cst_180 : f32 to vector<1x128xf32>
    %329 = arith.addf %328, %327 : vector<1x128xf32>
    %330 = math.absf %329 : vector<1x128xf32>
    %cst_181 = arith.constant 9.99999971E-10 : f32
    %331 = vector.broadcast %cst_181 : f32 to vector<1x128xf32>
    %332 = arith.addf %330, %331 : vector<1x128xf32>
    %333 = math.log %332 : vector<1x128xf32>
    %c12_182 = arith.constant 12 : index
    %c0_183 = arith.constant 0 : index
    %334 = vector.load %arg8[%c12_182, %c0_183] : memref<16x128xf32, #tpu.memory_space<vmem>>, vector<1x128xf32>
    tpu.vector_store %arg8[%c12_182, %c0_183], %333 {strides = array<i32>} : memref<16x128xf32, #tpu.memory_space<vmem>>, vector<1x128xf32>,
    %c12_184 = arith.constant 12 : index
    %c0_185 = arith.constant 0 : index
    %335 = vector.load %arg10[%c12_184, %c0_185] : memref<16x128xf32, #tpu.memory_space<vmem>>, vector<1x128xf32>
    tpu.vector_store %arg10[%c12_184, %c0_185], %321 {strides = array<i32>} : memref<16x128xf32, #tpu.memory_space<vmem>>, vector<1x128xf32>,
    %c0_186 = arith.constant 0 : index
    %c0_187 = arith.constant 0 : index
    %336 = vector.load %arg9[%c0_186, %c0_187] : memref<16x128xf32, #tpu.memory_space<vmem>>, vector<16x128xf32>
    %337 = vector.extract_strided_slice %4 {offsets = [0, 12], sizes = [16, 1], strides = [1, 1]} : vector<16x16xf32> to vector<16x1xf32>
    %338 = vector.broadcast %337 : vector<16x1xf32> to vector<16x128xf32>
    %339 = vector.broadcast %321 : vector<1x128xf32> to vector<16x128xf32>
    %340 = arith.mulf %338, %339 : vector<16x128xf32>
    %341 = arith.addf %336, %340 : vector<16x128xf32>
    %c0_188 = arith.constant 0 : index
    %c0_189 = arith.constant 0 : index
    %342 = vector.load %arg9[%c0_188, %c0_189] : memref<16x128xf32, #tpu.memory_space<vmem>>, vector<16x128xf32>
    tpu.vector_store %arg9[%c0_188, %c0_189], %341 {strides = array<i32>} : memref<16x128xf32, #tpu.memory_space<vmem>>, vector<16x128xf32>,
    %c13 = arith.constant 13 : index
    %c0_190 = arith.constant 0 : index
    %343 = vector.load %arg9[%c13, %c0_190] : memref<16x128xf32, #tpu.memory_space<vmem>>, vector<1x128xf32>
    %c13_191 = arith.constant 13 : index
    %344 = memref.load %arg5[%c13_191] : memref<16xf32, #tpu.memory_space<smem>>
    %345 = vector.broadcast %344 : f32 to vector<1x128xf32>
    %346 = arith.addf %343, %345 : vector<1x128xf32>
    %347 = math.tanh %346 : vector<1x128xf32>
    %348 = arith.mulf %347, %347 : vector<1x128xf32>
    %cst_192 = arith.constant 1.000000e+00 : f32
    %349 = vector.broadcast %cst_192 : f32 to vector<1x128xf32>
    %350 = arith.subf %349, %348 : vector<1x128xf32>
    %c13_193 = arith.constant 13 : index
    %351 = memref.load %arg6[%c13_193] : memref<16xf32, #tpu.memory_space<smem>>
    %352 = vector.broadcast %351 : f32 to vector<1x128xf32>
    %353 = arith.mulf %350, %352 : vector<1x128xf32>
    %cst_194 = arith.constant 1.000000e+00 : f32
    %354 = vector.broadcast %cst_194 : f32 to vector<1x128xf32>
    %355 = arith.addf %354, %353 : vector<1x128xf32>
    %356 = math.absf %355 : vector<1x128xf32>
    %cst_195 = arith.constant 9.99999971E-10 : f32
    %357 = vector.broadcast %cst_195 : f32 to vector<1x128xf32>
    %358 = arith.addf %356, %357 : vector<1x128xf32>
    %359 = math.log %358 : vector<1x128xf32>
    %c13_196 = arith.constant 13 : index
    %c0_197 = arith.constant 0 : index
    %360 = vector.load %arg8[%c13_196, %c0_197] : memref<16x128xf32, #tpu.memory_space<vmem>>, vector<1x128xf32>
    tpu.vector_store %arg8[%c13_196, %c0_197], %359 {strides = array<i32>} : memref<16x128xf32, #tpu.memory_space<vmem>>, vector<1x128xf32>,
    %c13_198 = arith.constant 13 : index
    %c0_199 = arith.constant 0 : index
    %361 = vector.load %arg10[%c13_198, %c0_199] : memref<16x128xf32, #tpu.memory_space<vmem>>, vector<1x128xf32>
    tpu.vector_store %arg10[%c13_198, %c0_199], %347 {strides = array<i32>} : memref<16x128xf32, #tpu.memory_space<vmem>>, vector<1x128xf32>,
    %c0_200 = arith.constant 0 : index
    %c0_201 = arith.constant 0 : index
    %362 = vector.load %arg9[%c0_200, %c0_201] : memref<16x128xf32, #tpu.memory_space<vmem>>, vector<16x128xf32>
    %363 = vector.extract_strided_slice %4 {offsets = [0, 13], sizes = [16, 1], strides = [1, 1]} : vector<16x16xf32> to vector<16x1xf32>
    %364 = vector.broadcast %363 : vector<16x1xf32> to vector<16x128xf32>
    %365 = vector.broadcast %347 : vector<1x128xf32> to vector<16x128xf32>
    %366 = arith.mulf %364, %365 : vector<16x128xf32>
    %367 = arith.addf %362, %366 : vector<16x128xf32>
    %c0_202 = arith.constant 0 : index
    %c0_203 = arith.constant 0 : index
    %368 = vector.load %arg9[%c0_202, %c0_203] : memref<16x128xf32, #tpu.memory_space<vmem>>, vector<16x128xf32>
    tpu.vector_store %arg9[%c0_202, %c0_203], %367 {strides = array<i32>} : memref<16x128xf32, #tpu.memory_space<vmem>>, vector<16x128xf32>,
    %c14 = arith.constant 14 : index
    %c0_204 = arith.constant 0 : index
    %369 = vector.load %arg9[%c14, %c0_204] : memref<16x128xf32, #tpu.memory_space<vmem>>, vector<1x128xf32>
    %c14_205 = arith.constant 14 : index
    %370 = memref.load %arg5[%c14_205] : memref<16xf32, #tpu.memory_space<smem>>
    %371 = vector.broadcast %370 : f32 to vector<1x128xf32>
    %372 = arith.addf %369, %371 : vector<1x128xf32>
    %373 = math.tanh %372 : vector<1x128xf32>
    %374 = arith.mulf %373, %373 : vector<1x128xf32>
    %cst_206 = arith.constant 1.000000e+00 : f32
    %375 = vector.broadcast %cst_206 : f32 to vector<1x128xf32>
    %376 = arith.subf %375, %374 : vector<1x128xf32>
    %c14_207 = arith.constant 14 : index
    %377 = memref.load %arg6[%c14_207] : memref<16xf32, #tpu.memory_space<smem>>
    %378 = vector.broadcast %377 : f32 to vector<1x128xf32>
    %379 = arith.mulf %376, %378 : vector<1x128xf32>
    %cst_208 = arith.constant 1.000000e+00 : f32
    %380 = vector.broadcast %cst_208 : f32 to vector<1x128xf32>
    %381 = arith.addf %380, %379 : vector<1x128xf32>
    %382 = math.absf %381 : vector<1x128xf32>
    %cst_209 = arith.constant 9.99999971E-10 : f32
    %383 = vector.broadcast %cst_209 : f32 to vector<1x128xf32>
    %384 = arith.addf %382, %383 : vector<1x128xf32>
    %385 = math.log %384 : vector<1x128xf32>
    %c14_210 = arith.constant 14 : index
    %c0_211 = arith.constant 0 : index
    %386 = vector.load %arg8[%c14_210, %c0_211] : memref<16x128xf32, #tpu.memory_space<vmem>>, vector<1x128xf32>
    tpu.vector_store %arg8[%c14_210, %c0_211], %385 {strides = array<i32>} : memref<16x128xf32, #tpu.memory_space<vmem>>, vector<1x128xf32>,
    %c14_212 = arith.constant 14 : index
    %c0_213 = arith.constant 0 : index
    %387 = vector.load %arg10[%c14_212, %c0_213] : memref<16x128xf32, #tpu.memory_space<vmem>>, vector<1x128xf32>
    tpu.vector_store %arg10[%c14_212, %c0_213], %373 {strides = array<i32>} : memref<16x128xf32, #tpu.memory_space<vmem>>, vector<1x128xf32>,
    %c0_214 = arith.constant 0 : index
    %c0_215 = arith.constant 0 : index
    %388 = vector.load %arg9[%c0_214, %c0_215] : memref<16x128xf32, #tpu.memory_space<vmem>>, vector<16x128xf32>
    %389 = vector.extract_strided_slice %4 {offsets = [0, 14], sizes = [16, 1], strides = [1, 1]} : vector<16x16xf32> to vector<16x1xf32>
    %390 = vector.broadcast %389 : vector<16x1xf32> to vector<16x128xf32>
    %391 = vector.broadcast %373 : vector<1x128xf32> to vector<16x128xf32>
    %392 = arith.mulf %390, %391 : vector<16x128xf32>
    %393 = arith.addf %388, %392 : vector<16x128xf32>
    %c0_216 = arith.constant 0 : index
    %c0_217 = arith.constant 0 : index
    %394 = vector.load %arg9[%c0_216, %c0_217] : memref<16x128xf32, #tpu.memory_space<vmem>>, vector<16x128xf32>
    tpu.vector_store %arg9[%c0_216, %c0_217], %393 {strides = array<i32>} : memref<16x128xf32, #tpu.memory_space<vmem>>, vector<16x128xf32>,
    %c15 = arith.constant 15 : index
    %c0_218 = arith.constant 0 : index
    %395 = vector.load %arg9[%c15, %c0_218] : memref<16x128xf32, #tpu.memory_space<vmem>>, vector<1x128xf32>
    %c15_219 = arith.constant 15 : index
    %396 = memref.load %arg5[%c15_219] : memref<16xf32, #tpu.memory_space<smem>>
    %397 = vector.broadcast %396 : f32 to vector<1x128xf32>
    %398 = arith.addf %395, %397 : vector<1x128xf32>
    %399 = math.tanh %398 : vector<1x128xf32>
    %400 = arith.mulf %399, %399 : vector<1x128xf32>
    %cst_220 = arith.constant 1.000000e+00 : f32
    %401 = vector.broadcast %cst_220 : f32 to vector<1x128xf32>
    %402 = arith.subf %401, %400 : vector<1x128xf32>
    %c15_221 = arith.constant 15 : index
    %403 = memref.load %arg6[%c15_221] : memref<16xf32, #tpu.memory_space<smem>>
    %404 = vector.broadcast %403 : f32 to vector<1x128xf32>
    %405 = arith.mulf %402, %404 : vector<1x128xf32>
    %cst_222 = arith.constant 1.000000e+00 : f32
    %406 = vector.broadcast %cst_222 : f32 to vector<1x128xf32>
    %407 = arith.addf %406, %405 : vector<1x128xf32>
    %408 = math.absf %407 : vector<1x128xf32>
    %cst_223 = arith.constant 9.99999971E-10 : f32
    %409 = vector.broadcast %cst_223 : f32 to vector<1x128xf32>
    %410 = arith.addf %408, %409 : vector<1x128xf32>
    %411 = math.log %410 : vector<1x128xf32>
    %c15_224 = arith.constant 15 : index
    %c0_225 = arith.constant 0 : index
    %412 = vector.load %arg8[%c15_224, %c0_225] : memref<16x128xf32, #tpu.memory_space<vmem>>, vector<1x128xf32>
    tpu.vector_store %arg8[%c15_224, %c0_225], %411 {strides = array<i32>} : memref<16x128xf32, #tpu.memory_space<vmem>>, vector<1x128xf32>,
    %c15_226 = arith.constant 15 : index
    %c0_227 = arith.constant 0 : index
    %413 = vector.load %arg10[%c15_226, %c0_227] : memref<16x128xf32, #tpu.memory_space<vmem>>, vector<1x128xf32>
    tpu.vector_store %arg10[%c15_226, %c0_227], %399 {strides = array<i32>} : memref<16x128xf32, #tpu.memory_space<vmem>>, vector<1x128xf32>,
    %c0_228 = arith.constant 0 : index
    %c0_229 = arith.constant 0 : index
    %414 = vector.load %arg1[%c0_228, %c0_229] : memref<16x128xf32, #tpu.memory_space<vmem>>, vector<16x128xf32>
    %c0_230 = arith.constant 0 : index
    %c0_231 = arith.constant 0 : index
    %415 = vector.load %arg3[%c0_230, %c0_231] : memref<16x16xf32, #tpu.memory_space<vmem>>, vector<16x16xf32>
    %c0_232 = arith.constant 0 : index
    %c0_233 = arith.constant 0 : index
    %416 = vector.load %arg10[%c0_232, %c0_233] : memref<16x128xf32, #tpu.memory_space<vmem>>, vector<16x128xf32>
    %cst_234 = arith.constant dense<0.000000e+00> : vector<16x128xf32>
    %417 = tpu.matmul %415, %416, %cst_234 {dimension_numbers = #tpu.dot_dimension_numbers<[1], [0], [0], [1], [0, 0, 1, 1], [], []>, precision = #tpu.contract_precision<fp32>} : vector<16x16xf32>, vector<16x128xf32>, vector<16x128xf32> -> vector<16x128xf32>
    %418 = arith.addf %414, %417 : vector<16x128xf32>
    %c0_235 = arith.constant 0 : index
    %c0_236 = arith.constant 0 : index
    %419 = vector.load %arg7[%c0_235, %c0_236] : memref<16x128xf32, #tpu.memory_space<vmem>>, vector<16x128xf32>
    tpu.vector_store %arg7[%c0_235, %c0_236], %418 {strides = array<i32>} : memref<16x128xf32, #tpu.memory_space<vmem>>, vector<16x128xf32>,
    return
  }
  func.func @transform_0(%arg0: i32) -> (i32, i32) {
    %c0_i32 = arith.constant 0 : i32
    %c0_i32_0 = arith.constant 0 : i32
    return %c0_i32, %arg0 : i32, i32
  }
  func.func @transform_1(%arg0: i32) -> (i32, i32) {
    %c0_i32 = arith.constant 0 : i32
    %c0_i32_0 = arith.constant 0 : i32
    %c0_i32_1 = arith.constant 0 : i32
    return %c0_i32, %c0_i32_0 : i32, i32
  }
  func.func @transform_2(%arg0: i32) -> (i32, i32) {
    %c0_i32 = arith.constant 0 : i32
    %c0_i32_0 = arith.constant 0 : i32
    %c0_i32_1 = arith.constant 0 : i32
    return %c0_i32, %c0_i32_0 : i32, i32
  }
  func.func @transform_3(%arg0: i32) -> (i32, i32) {
    %c0_i32 = arith.constant 0 : i32
    %c0_i32_0 = arith.constant 0 : i32
    %c0_i32_1 = arith.constant 0 : i32
    return %c0_i32, %c0_i32_0 : i32, i32
  }
  func.func @transform_4(%arg0: i32) -> i32 {
    %c0_i32 = arith.constant 0 : i32
    %c0_i32_0 = arith.constant 0 : i32
    return %c0_i32 : i32
  }
  func.func @transform_5(%arg0: i32) -> i32 {
    %c0_i32 = arith.constant 0 : i32
    %c0_i32_0 = arith.constant 0 : i32
    return %c0_i32 : i32
  }
  func.func @transform_6(%arg0: i32) -> (i32, i32) {
    %c0_i32 = arith.constant 0 : i32
    %c0_i32_0 = arith.constant 0 : i32
    return %c0_i32, %arg0 : i32, i32
  }
  func.func @transform_7(%arg0: i32) -> (i32, i32) {
    %c0_i32 = arith.constant 0 : i32
    %c0_i32_0 = arith.constant 0 : i32
    return %c0_i32, %arg0 : i32, i32
  }
}

</mosaic_0001>

<llo_original>
// kernel: tpu_custom_call.1
$region0: #{tpu_custom_call.1}
  #allocation0 [shape = 'u32[]', space=smem, size = 0x4, offset = 0x4, fixed_abs, tag = 'smem constant byte address 0x4 - core index']
  #allocation1 [shape = 'u32[144,128]{1,0:T(1,128)}', space=vmem, size = 0x12000, scoped, tag = 'internal scratch']
  #allocation2 [shape = 'f32[16,128]{1,0:T(8,128)}', space=vmem, size = 0x2000, scoped, tag = 'scratch operand']
  #allocation3 [shape = 'f32[16,128]{1,0:T(8,128)}', space=vmem, size = 0x2000, scoped, tag = 'scratch operand']
  %s0 = inlined_call_operand.hbm [shape: f32[16,128], index: 0, kind: input, shape index: {}]
  %s1 = inlined_call_operand.hbm [shape: f32[16,16], index: 1, kind: input, shape index: {}]
  %s2 = inlined_call_operand.hbm [shape: f32[16,16], index: 2, kind: input, shape index: {}]
  %s3 = inlined_call_operand.hbm [shape: f32[16,16], index: 3, kind: input, shape index: {}]
  %s4 = inlined_call_operand.vmem [shape: f32[16], index: 4, kind: input, shape index: {}]
  %s5 = inlined_call_operand.vmem [shape: f32[16], index: 5, kind: input, shape index: {}]
  %s6 = inlined_call_operand.hbm [shape: f32[16,128], index: 6, kind: output, shape index: {0}]
  %s7 = inlined_call_operand.hbm [shape: f32[16,128], index: 7, kind: output, shape index: {1}]
  %8 = xla_tuple %s6, %s7
  %s9 = sld [smem:[#allocation0]]
  $region66: #{tpu_custom_call.1} parent=0
    _
  %s11 = ssub.s32 1, %s9
  %s12 = scalar_select 0, %s11, %s9
  $region1: #{tpu_custom_call.1} parent=0
    #allocation4 [shape = 'u8[8192]{0}', space=vmem, size = 0x2000, scoped, tag = 'input window, operand 0, single buffered']
    #allocation5 [shape = 's32[1]{0}', space=sflag, size = 0x4, scoped, tag = 'scoped memory for tpu_custom_call.1']
    #allocation6 [shape = 's32[1]{0}', space=sflag, size = 0x4, scoped, tag = 'scoped memory for tpu_custom_call.1']
    #allocation7 [shape = 's32[1]{0}', space=sflag, size = 0x4, scoped, tag = 'scoped memory for tpu_custom_call.1']
    #allocation8 [shape = 'u8[8192]{0}', space=vmem, size = 0x2000, scoped, tag = 'input window, operand 1, single buffered']
    #allocation9 [shape = 's32[1]{0}', space=sflag, size = 0x4, scoped, tag = 'scoped memory for tpu_custom_call.1']
    #allocation10 [shape = 'u8[8192]{0}', space=vmem, size = 0x2000, scoped, tag = 'input window, operand 2, single buffered']
    #allocation11 [shape = 'u8[8192]{0}', space=vmem, size = 0x2000, scoped, tag = 'input window, operand 3, single buffered']
    #allocation12 [shape = 's32[1]{0}', space=sflag, size = 0x4, scoped, tag = 'scoped memory for tpu_custom_call.1']
    #allocation13 [shape = 'u8[512]{0}', space=smem, size = 0x200, scoped, tag = 'input window, operand 4, single buffered']
    #allocation14 [shape = 'u8[512]{0}', space=smem, size = 0x200, scoped, tag = 'input window, operand 5, single buffered']
    #allocation15 [shape = 's32[1]{0}', space=sflag, size = 0x4, scoped, tag = 'scoped memory for tpu_custom_call.1']
    #allocation16 [shape = 'u8[8192]{0}', space=vmem, size = 0x2000, scoped, tag = 'output window, operand 0, single buffered']
    #allocation17 [shape = 'u8[8192]{0}', space=vmem, size = 0x2000, scoped, tag = 'output window, operand 1, single buffered']
    #allocation18 [shape = 's32[1]{0}', space=sflag, size = 0x4, scoped, tag = 'scoped memory for tpu_custom_call.1']
    %13 = vsyncpa [#allocation5], 0
    %14 = vsyncpa [#allocation9], 0
    %15 = vsyncpa [#allocation12], 0
    %16 = vsyncpa [#allocation7], 0
    %17 = vsyncpa [#allocation15], 0
    %18 = vsyncpa [#allocation6], 0
    %19 = vsyncpa [#allocation18], 0
    // Predicated region
    $region2: #{tpu_custom_call.1} parent=1 // pred_check
      _
    $region3: #{tpu_custom_call.1} parent=1 // pred_check_branch
      %21 = sbr.rel (0) target = $region5
    $region4: #{tpu_custom_call.1} parent=1 // pred_region
      %s23 = ssub.s32 256, 256
      %24 = vsyncadd [#allocation5], %s23
      %s25 = sshll.u32 [#allocation4], 4
      %s26 = int_to_ptr.vmem [resolvable:$true] %s25
      %31 = dma.hbm_to_vmem [thread:$0]  %s0, 256, %s26, [#allocation5], 128, 128, 8
    $region5: #{tpu_custom_call.1} parent=1 // pred_fallthru
      _
    // Predicated region
    $region6: #{tpu_custom_call.1} parent=1 // pred_check
      _
    $region7: #{tpu_custom_call.1} parent=1 // pred_check_branch
      %33 = sbr.rel (0) target = $region9
    $region8: #{tpu_custom_call.1} parent=1 // pred_region
      %s35 = ssub.s32 256, 256
      %36 = vsyncadd [#allocation9], %s35
      %s37 = sshll.u32 [#allocation8], 4
      %s38 = int_to_ptr.vmem [resolvable:$true] %s37
      %43 = dma.hbm_to_vmem [thread:$0]  %s1, 256, %s38, [#allocation9], 128, 128, 8
    $region9: #{tpu_custom_call.1} parent=1 // pred_fallthru
      _
    // Predicated region
    $region10: #{tpu_custom_call.1} parent=1 // pred_check
      _
    $region11: #{tpu_custom_call.1} parent=1 // pred_check_branch
      %45 = sbr.rel (0) target = $region13
    $region12: #{tpu_custom_call.1} parent=1 // pred_region
      %s47 = ssub.s32 256, 256
      %48 = vsyncadd [#allocation9], %s47
      %s49 = sshll.u32 [#allocation10], 4
      %s50 = int_to_ptr.vmem [resolvable:$true] %s49
      %55 = dma.hbm_to_vmem [thread:$0]  %s2, 256, %s50, [#allocation9], 128, 128, 8
    $region13: #{tpu_custom_call.1} parent=1 // pred_fallthru
      _
    // Predicated region
    $region14: #{tpu_custom_call.1} parent=1 // pred_check
      _
    $region15: #{tpu_custom_call.1} parent=1 // pred_check_branch
      %57 = sbr.rel (0) target = $region17
    $region16: #{tpu_custom_call.1} parent=1 // pred_region
      %s59 = ssub.s32 256, 256
      %60 = vsyncadd [#allocation12], %s59
      %s61 = sshll.u32 [#allocation11], 4
      %s62 = int_to_ptr.vmem [resolvable:$true] %s61
      %67 = dma.hbm_to_vmem [thread:$0]  %s3, 256, %s62, [#allocation12], 128, 128, 8
    $region17: #{tpu_custom_call.1} parent=1 // pred_fallthru
      _
    // Predicated region
    $region18: #{tpu_custom_call.1} parent=1 // pred_check
      _
    $region19: #{tpu_custom_call.1} parent=1 // pred_check_branch
      %69 = sbr.rel (0) target = $region21
    $region20: #{tpu_custom_call.1} parent=1 // pred_region
      %s71 = ssub.s32 16, 16
      %72 = vsyncadd [#allocation7], %s71
      %s74 = sshll.u32 %s4, 4
      %s75 = int_to_ptr.vmem [resolvable:$true] %s74
      %77 = dma.vmem_to_smem %s75, 16, [#allocation13], [#allocation7]
    $region21: #{tpu_custom_call.1} parent=1 // pred_fallthru
      _
    // Predicated region
    $region22: #{tpu_custom_call.1} parent=1 // pred_check
      _
    $region23: #{tpu_custom_call.1} parent=1 // pred_check_branch
      %79 = sbr.rel (0) target = $region25
    $region24: #{tpu_custom_call.1} parent=1 // pred_region
      %s81 = ssub.s32 16, 16
      %82 = vsyncadd [#allocation15], %s81
      %s84 = sshll.u32 %s5, 4
      %s85 = int_to_ptr.vmem [resolvable:$true] %s84
      %87 = dma.vmem_to_smem %s85, 16, [#allocation14], [#allocation15]
    $region25: #{tpu_custom_call.1} parent=1 // pred_fallthru
      _
    // Predicated region
    $region26: #{tpu_custom_call.1} parent=1 // pred_check
      _
    $region27: #{tpu_custom_call.1} parent=1 // pred_check_branch
      %89 = sbr.rel (0) target = $region29
    $region28: #{tpu_custom_call.1} parent=1 // pred_region
      %90 = dma.done [#allocation5], 256
    $region29: #{tpu_custom_call.1} parent=1 // pred_fallthru
      _
    // Predicated region
    $region30: #{tpu_custom_call.1} parent=1 // pred_check
      _
    $region31: #{tpu_custom_call.1} parent=1 // pred_check_branch
      %92 = sbr.rel (0) target = $region33
    $region32: #{tpu_custom_call.1} parent=1 // pred_region
      %93 = dma.done [#allocation9], 256
    $region33: #{tpu_custom_call.1} parent=1 // pred_fallthru
      _
    // Predicated region
    $region34: #{tpu_custom_call.1} parent=1 // pred_check
      _
    $region35: #{tpu_custom_call.1} parent=1 // pred_check_branch
      %95 = sbr.rel (0) target = $region37
    $region36: #{tpu_custom_call.1} parent=1 // pred_region
      %96 = dma.done [#allocation9], 256
    $region37: #{tpu_custom_call.1} parent=1 // pred_fallthru
      _
    // Predicated region
    $region38: #{tpu_custom_call.1} parent=1 // pred_check
      _
    $region39: #{tpu_custom_call.1} parent=1 // pred_check_branch
      %98 = sbr.rel (0) target = $region41
    $region40: #{tpu_custom_call.1} parent=1 // pred_region
      %99 = dma.done [#allocation12], 256
    $region41: #{tpu_custom_call.1} parent=1 // pred_fallthru
      _
    // Predicated region
    $region42: #{tpu_custom_call.1} parent=1 // pred_check
      _
    $region43: #{tpu_custom_call.1} parent=1 // pred_check_branch
      %101 = sbr.rel (0) target = $region45
    $region44: #{tpu_custom_call.1} parent=1 // pred_region
      %102 = dma.done [#allocation7], 16
    $region45: #{tpu_custom_call.1} parent=1 // pred_fallthru
      _
    // Predicated region
    $region46: #{tpu_custom_call.1} parent=1 // pred_check
      _
    $region47: #{tpu_custom_call.1} parent=1 // pred_check_branch
      %104 = sbr.rel (0) target = $region49
    $region48: #{tpu_custom_call.1} parent=1 // pred_region
      %105 = dma.done [#allocation15], 16
    $region49: #{tpu_custom_call.1} parent=1 // pred_fallthru
      _
    %106 = sfence
    %v107 = vld [vmem:[#allocation8] sm:$0xff]
    %v108 = vld [vmem:[#allocation8 + $0x8] sm:$0xff]
    %v109 = vld [vmem:[#allocation4] sm:$0xff]
    %v110 = vld [vmem:[#allocation4 + $0x8] sm:$0xff]
    %vm111 = vcmask 130048
    %v113 = vsel %vm111, %v107, 0
    %v116 = vsel %vm111, %v108, 0
    %118 = vmatprep.subr.mxu0 0.0
    %119 = vmatpush1.msra.mxu0 0.0
    %120 = vmatprep.subr.mxu0 0.0
    %121 = vmatpush1.msra.mxu0 0.0
    %122 = vmatprep.subr.mxu0 0.0
    %123 = vmatpush1.msra.mxu0 0.0
    %124 = vmatprep.subr.mxu0 0.0
    %125 = vmatpush1.msra.mxu0 0.0
    %126 = vmatprep.subr.mxu0 0.0
    %127 = vmatpush1.msra.mxu0 0.0
    %128 = vmatprep.subr.mxu0 0.0
    %129 = vmatpush1.msra.mxu0 0.0
    %130 = vmatprep.subr.mxu0 0.0
    %131 = vmatpush1.msra.mxu0 0.0
    %132 = vmatprep.subr.mxu0 0.0
    %133 = vmatpush1.msra.mxu0 0.0
    %134 = vmatprep.subr.mxu0 0.0
    %135 = vmatpush1.msra.mxu0 0.0
    %136 = vmatprep.subr.mxu0 0.0
    %137 = vmatpush1.msra.mxu0 0.0
    %138 = vmatprep.subr.mxu0 0.0
    %139 = vmatpush1.msra.mxu0 0.0
    %140 = vmatprep.subr.mxu0 0.0
    %141 = vmatpush1.msra.mxu0 0.0
    %142 = vmatprep.subr.mxu0 0.0
    %143 = vmatpush1.msra.mxu0 0.0
    %144 = vmatprep.subr.mxu0 0.0
    %145 = vmatpush1.msra.mxu0 0.0
    %146 = vmatprep.subr.mxu0 0.0
    %v147 = vand.u32 %v110, 4294901760
    %148 = vmatpush1.msra.mxu0 %v147
    %149 = vmatprep.subr.mxu0 0.0
    %v150 = vand.u32 %v109, 4294901760
    %151 = vmatpush1.msra.mxu0 %v150
    %152 = vmatprep.subr.mxu0 0.0
    %153 = vmatpush2.msra.mxu0 0.0
    %154 = vmatprep.subr.mxu0 0.0
    %155 = vmatpush2.msra.mxu0 0.0
    %156 = vmatprep.subr.mxu0 0.0
    %157 = vmatpush2.msra.mxu0 0.0
    %158 = vmatprep.subr.mxu0 0.0
    %159 = vmatpush2.msra.mxu0 0.0
    %160 = vmatprep.subr.mxu0 0.0
    %161 = vmatpush2.msra.mxu0 0.0
    %162 = vmatprep.subr.mxu0 0.0
    %163 = vmatpush2.msra.mxu0 0.0
    %164 = vmatprep.subr.mxu0 0.0
    %165 = vmatpush2.msra.mxu0 0.0
    %166 = vmatprep.subr.mxu0 0.0
    %167 = vmatpush2.msra.mxu0 0.0
    %168 = vmatprep.subr.mxu0 0.0
    %169 = vmatpush2.msra.mxu0 0.0
    %170 = vmatprep.subr.mxu0 0.0
    %171 = vmatpush2.msra.mxu0 0.0
    %172 = vmatprep.subr.mxu0 0.0
    %173 = vmatpush2.msra.mxu0 0.0
    %174 = vmatprep.subr.mxu0 0.0
    %175 = vmatpush2.msra.mxu0 0.0
    %176 = vmatprep.subr.mxu0 0.0
    %177 = vmatpush2.msra.mxu0 0.0
    %178 = vmatprep.subr.mxu0 0.0
    %179 = vmatpush2.msra.mxu0 0.0
    %180 = vmatprep.subr.mxu0 0.0
    %181 = vmatpush2.msra.mxu0 0.0
    %182 = vmatprep.subr.mxu0 0.0
    %183 = vmatpush2.msra.mxu0 0.0
    %184 = vmatprep.mubr.f32.mxu0 0.0
    %v185 = vand.u32 %v113, 4294901760
    %v186 = vsub.f32 %v113, %v185
    %v187 = vand.u32 %v186, 4294901760
    %v188 = vsub.f32 %v186, %v187
    %v189 = vand.u32 %v188, 4294901760
    %190 = vmatmul.mubr.f32.gmra.mxu0 %v189
    %v191 = vpop.f32.mrf.mxu0
    %v192 = vadd.f32 0.0, %v191
    %v193 = vpop.f32.mrf.mxu0
    %194 = vmatprep.mubr.f32.mxu0 0.0
    %v195 = vand.u32 %v116, 4294901760
    %v196 = vsub.f32 %v116, %v195
    %v197 = vand.u32 %v196, 4294901760
    %v198 = vsub.f32 %v196, %v197
    %v199 = vand.u32 %v198, 4294901760
    %200 = vmatmul.mubr.f32.gmra.mxu0 %v199
    %v201 = vpop.f32.mrf.mxu0
    %v202 = vadd.f32 0.0, %v201
    %v203 = vpop.f32.mrf.mxu0
    %204 = vdwg.mxu0
    %205 = vmatprep.subr.mxu0 0.0
    %206 = vmatpush1.msra.mxu0 0.0
    %207 = vmatprep.subr.mxu0 0.0
    %208 = vmatpush1.msra.mxu0 0.0
    %209 = vmatprep.subr.mxu0 0.0
    %210 = vmatpush1.msra.mxu0 0.0
    %211 = vmatprep.subr.mxu0 0.0
    %212 = vmatpush1.msra.mxu0 0.0
    %213 = vmatprep.subr.mxu0 0.0
    %214 = vmatpush1.msra.mxu0 0.0
    %215 = vmatprep.subr.mxu0 0.0
    %216 = vmatpush1.msra.mxu0 0.0
    %217 = vmatprep.subr.mxu0 0.0
    %218 = vmatpush1.msra.mxu0 0.0
    %219 = vmatprep.subr.mxu0 0.0
    %220 = vmatpush1.msra.mxu0 0.0
    %221 = vmatprep.subr.mxu0 0.0
    %222 = vmatpush1.msra.mxu0 0.0
    %223 = vmatprep.subr.mxu0 0.0
    %224 = vmatpush1.msra.mxu0 0.0
    %225 = vmatprep.subr.mxu0 0.0
    %226 = vmatpush1.msra.mxu0 0.0
    %227 = vmatprep.subr.mxu0 0.0
    %228 = vmatpush1.msra.mxu0 0.0
    %229 = vmatprep.subr.mxu0 0.0
    %230 = vmatpush1.msra.mxu0 0.0
    %231 = vmatprep.subr.mxu0 0.0
    %232 = vmatpush1.msra.mxu0 0.0
    %233 = vmatprep.subr.mxu0 0.0
    %v234 = vand.u32 %v110, 4294901760
    %v235 = vsub.f32 %v110, %v234
    %v236 = vand.u32 %v235, 4294901760
    %v237 = vsub.f32 %v235, %v236
    %v238 = vand.u32 %v237, 4294901760
    %239 = vmatpush1.msra.mxu0 %v238
    %240 = vmatprep.subr.mxu0 0.0
    %v241 = vand.u32 %v109, 4294901760
    %v242 = vsub.f32 %v109, %v241
    %v243 = vand.u32 %v242, 4294901760
    %v244 = vsub.f32 %v242, %v243
    %v245 = vand.u32 %v244, 4294901760
    %246 = vmatpush1.msra.mxu0 %v245
    %247 = vmatprep.subr.mxu0 0.0
    %248 = vmatpush2.msra.mxu0 0.0
    %249 = vmatprep.subr.mxu0 0.0
    %250 = vmatpush2.msra.mxu0 0.0
    %251 = vmatprep.subr.mxu0 0.0
    %252 = vmatpush2.msra.mxu0 0.0
    %253 = vmatprep.subr.mxu0 0.0
    %254 = vmatpush2.msra.mxu0 0.0
    %255 = vmatprep.subr.mxu0 0.0
    %256 = vmatpush2.msra.mxu0 0.0
    %257 = vmatprep.subr.mxu0 0.0
    %258 = vmatpush2.msra.mxu0 0.0
    %259 = vmatprep.subr.mxu0 0.0
    %260 = vmatpush2.msra.mxu0 0.0
    %261 = vmatprep.subr.mxu0 0.0
    %262 = vmatpush2.msra.mxu0 0.0
    %263 = vmatprep.subr.mxu0 0.0
    %264 = vmatpush2.msra.mxu0 0.0
    %265 = vmatprep.subr.mxu0 0.0
    %266 = vmatpush2.msra.mxu0 0.0
    %267 = vmatprep.subr.mxu0 0.0
    %268 = vmatpush2.msra.mxu0 0.0
    %269 = vmatprep.subr.mxu0 0.0
    %270 = vmatpush2.msra.mxu0 0.0
    %271 = vmatprep.subr.mxu0 0.0
    %272 = vmatpush2.msra.mxu0 0.0
    %273 = vmatprep.subr.mxu0 0.0
    %274 = vmatpush2.msra.mxu0 0.0
    %275 = vmatprep.subr.mxu0 0.0
    %276 = vmatpush2.msra.mxu0 0.0
    %277 = vmatprep.subr.mxu0 0.0
    %278 = vmatpush2.msra.mxu0 0.0
    %279 = vmatprep.mubr.f32.mxu0 0.0
    %v280 = vand.u32 %v113, 4294901760
    %281 = vmatmul.mubr.f32.gmra.mxu0 %v280
    %v282 = vpop.f32.mrf.mxu0
    %v283 = vadd.f32 %v192, %v282
    %v284 = vpop.f32.mrf.mxu0
    %285 = vmatprep.mubr.f32.mxu0 0.0
    %v286 = vand.u32 %v116, 4294901760
    %287 = vmatmul.mubr.f32.gmra.mxu0 %v286
    %v288 = vpop.f32.mrf.mxu0
    %v289 = vadd.f32 %v202, %v288
    %v290 = vpop.f32.mrf.mxu0
    %291 = vdwg.mxu0
    %292 = vmatprep.subr.mxu0 0.0
    %293 = vmatpush1.msra.mxu0 0.0
    %294 = vmatprep.subr.mxu0 0.0
    %295 = vmatpush1.msra.mxu0 0.0
    %296 = vmatprep.subr.mxu0 0.0
    %297 = vmatpush1.msra.mxu0 0.0
    %298 = vmatprep.subr.mxu0 0.0
    %299 = vmatpush1.msra.mxu0 0.0
    %300 = vmatprep.subr.mxu0 0.0
    %301 = vmatpush1.msra.mxu0 0.0
    %302 = vmatprep.subr.mxu0 0.0
    %303 = vmatpush1.msra.mxu0 0.0
    %304 = vmatprep.subr.mxu0 0.0
    %305 = vmatpush1.msra.mxu0 0.0
    %306 = vmatprep.subr.mxu0 0.0
    %307 = vmatpush1.msra.mxu0 0.0
    %308 = vmatprep.subr.mxu0 0.0
    %309 = vmatpush1.msra.mxu0 0.0
    %310 = vmatprep.subr.mxu0 0.0
    %311 = vmatpush1.msra.mxu0 0.0
    %312 = vmatprep.subr.mxu0 0.0
    %313 = vmatpush1.msra.mxu0 0.0
    %314 = vmatprep.subr.mxu0 0.0
    %315 = vmatpush1.msra.mxu0 0.0
    %316 = vmatprep.subr.mxu0 0.0
    %317 = vmatpush1.msra.mxu0 0.0
    %318 = vmatprep.subr.mxu0 0.0
    %319 = vmatpush1.msra.mxu0 0.0
    %320 = vmatprep.subr.mxu0 0.0
    %v321 = vand.u32 %v110, 4294901760
    %v322 = vsub.f32 %v110, %v321
    %323 = vmatpush1.msra.mxu0 %v322
    %324 = vmatprep.subr.mxu0 0.0
    %v325 = vand.u32 %v109, 4294901760
    %v326 = vsub.f32 %v109, %v325
    %327 = vmatpush1.msra.mxu0 %v326
    %328 = vmatprep.subr.mxu0 0.0
    %329 = vmatpush2.msra.mxu0 0.0
    %330 = vmatprep.subr.mxu0 0.0
    %331 = vmatpush2.msra.mxu0 0.0
    %332 = vmatprep.subr.mxu0 0.0
    %333 = vmatpush2.msra.mxu0 0.0
    %334 = vmatprep.subr.mxu0 0.0
    %335 = vmatpush2.msra.mxu0 0.0
    %336 = vmatprep.subr.mxu0 0.0
    %337 = vmatpush2.msra.mxu0 0.0
    %338 = vmatprep.subr.mxu0 0.0
    %339 = vmatpush2.msra.mxu0 0.0
    %340 = vmatprep.subr.mxu0 0.0
    %341 = vmatpush2.msra.mxu0 0.0
    %342 = vmatprep.subr.mxu0 0.0
    %343 = vmatpush2.msra.mxu0 0.0
    %344 = vmatprep.subr.mxu0 0.0
    %345 = vmatpush2.msra.mxu0 0.0
    %346 = vmatprep.subr.mxu0 0.0
    %347 = vmatpush2.msra.mxu0 0.0
    %348 = vmatprep.subr.mxu0 0.0
    %349 = vmatpush2.msra.mxu0 0.0
    %350 = vmatprep.subr.mxu0 0.0
    %351 = vmatpush2.msra.mxu0 0.0
    %352 = vmatprep.subr.mxu0 0.0
    %353 = vmatpush2.msra.mxu0 0.0
    %354 = vmatprep.subr.mxu0 0.0
    %355 = vmatpush2.msra.mxu0 0.0
    %356 = vmatprep.subr.mxu0 0.0
    %357 = vmatpush2.msra.mxu0 0.0
    %358 = vmatprep.subr.mxu0 0.0
    %359 = vmatpush2.msra.mxu0 0.0
    %360 = vmatprep.mubr.f32.mxu0 0.0
    %v361 = vand.u32 %v113, 4294901760
    %v362 = vsub.f32 %v113, %v361
    %363 = vmatmul.mubr.f32.gmra.mxu0 %v362
    %v364 = vpop.f32.mrf.mxu0
    %v365 = vadd.f32 %v283, %v364
    %v366 = vpop.f32.mrf.mxu0
    %367 = vmatprep.mubr.f32.mxu0 0.0
    %v368 = vand.u32 %v116, 4294901760
    %v369 = vsub.f32 %v116, %v368
    %370 = vmatmul.mubr.f32.gmra.mxu0 %v369
    %v371 = vpop.f32.mrf.mxu0
    %v372 = vadd.f32 %v289, %v371
    %v373 = vpop.f32.mrf.mxu0
    %374 = vdwg.mxu0
    %375 = vmatprep.subr.mxu0 0.0
    %376 = vmatpush1.msra.mxu0 0.0
    %377 = vmatprep.subr.mxu0 0.0
    %378 = vmatpush1.msra.mxu0 0.0
    %379 = vmatprep.subr.mxu0 0.0
    %380 = vmatpush1.msra.mxu0 0.0
    %381 = vmatprep.subr.mxu0 0.0
    %382 = vmatpush1.msra.mxu0 0.0
    %383 = vmatprep.subr.mxu0 0.0
    %384 = vmatpush1.msra.mxu0 0.0
    %385 = vmatprep.subr.mxu0 0.0
    %386 = vmatpush1.msra.mxu0 0.0
    %387 = vmatprep.subr.mxu0 0.0
    %388 = vmatpush1.msra.mxu0 0.0
    %389 = vmatprep.subr.mxu0 0.0
    %390 = vmatpush1.msra.mxu0 0.0
    %391 = vmatprep.subr.mxu0 0.0
    %392 = vmatpush1.msra.mxu0 0.0
    %393 = vmatprep.subr.mxu0 0.0
    %394 = vmatpush1.msra.mxu0 0.0
    %395 = vmatprep.subr.mxu0 0.0
    %396 = vmatpush1.msra.mxu0 0.0
    %397 = vmatprep.subr.mxu0 0.0
    %398 = vmatpush1.msra.mxu0 0.0
    %399 = vmatprep.subr.mxu0 0.0
    %400 = vmatpush1.msra.mxu0 0.0
    %401 = vmatprep.subr.mxu0 0.0
    %402 = vmatpush1.msra.mxu0 0.0
    %403 = vmatprep.subr.mxu0 0.0
    %v404 = vand.u32 %v110, 4294901760
    %405 = vmatpush1.msra.mxu0 %v404
    %406 = vmatprep.subr.mxu0 0.0
    %v407 = vand.u32 %v109, 4294901760
    %408 = vmatpush1.msra.mxu0 %v407
    %409 = vmatprep.subr.mxu0 0.0
    %410 = vmatpush2.msra.mxu0 0.0
    %411 = vmatprep.subr.mxu0 0.0
    %412 = vmatpush2.msra.mxu0 0.0
    %413 = vmatprep.subr.mxu0 0.0
    %414 = vmatpush2.msra.mxu0 0.0
    %415 = vmatprep.subr.mxu0 0.0
    %416 = vmatpush2.msra.mxu0 0.0
    %417 = vmatprep.subr.mxu0 0.0
    %418 = vmatpush2.msra.mxu0 0.0
    %419 = vmatprep.subr.mxu0 0.0
    %420 = vmatpush2.msra.mxu0 0.0
    %421 = vmatprep.subr.mxu0 0.0
    %422 = vmatpush2.msra.mxu0 0.0
    %423 = vmatprep.subr.mxu0 0.0
    %424 = vmatpush2.msra.mxu0 0.0
    %425 = vmatprep.subr.mxu0 0.0
    %426 = vmatpush2.msra.mxu0 0.0
    %427 = vmatprep.subr.mxu0 0.0
    %428 = vmatpush2.msra.mxu0 0.0
    %429 = vmatprep.subr.mxu0 0.0
    %430 = vmatpush2.msra.mxu0 0.0
    %431 = vmatprep.subr.mxu0 0.0
    %432 = vmatpush2.msra.mxu0 0.0
    %433 = vmatprep.subr.mxu0 0.0
    %434 = vmatpush2.msra.mxu0 0.0
    %435 = vmatprep.subr.mxu0 0.0
    %436 = vmatpush2.msra.mxu0 0.0
    %437 = vmatprep.subr.mxu0 0.0
    %438 = vmatpush2.msra.mxu0 0.0
    %439 = vmatprep.subr.mxu0 0.0
    %440 = vmatpush2.msra.mxu0 0.0
    %441 = vmatprep.mubr.f32.mxu0 0.0
    %v442 = vand.u32 %v113, 4294901760
    %v443 = vsub.f32 %v113, %v442
    %v444 = vand.u32 %v443, 4294901760
    %445 = vmatmul.mubr.f32.gmra.mxu0 %v444
    %v446 = vpop.f32.mrf.mxu0
    %v447 = vadd.f32 %v365, %v446
    %v448 = vpop.f32.mrf.mxu0
    %449 = vmatprep.mubr.f32.mxu0 0.0
    %v450 = vand.u32 %v116, 4294901760
    %v451 = vsub.f32 %v116, %v450
    %v452 = vand.u32 %v451, 4294901760
    %453 = vmatmul.mubr.f32.gmra.mxu0 %v452
    %v454 = vpop.f32.mrf.mxu0
    %v455 = vadd.f32 %v372, %v454
    %v456 = vpop.f32.mrf.mxu0
    %457 = vdwg.mxu0
    %458 = vmatprep.subr.mxu0 0.0
    %459 = vmatpush1.msra.mxu0 0.0
    %460 = vmatprep.subr.mxu0 0.0
    %461 = vmatpush1.msra.mxu0 0.0
    %462 = vmatprep.subr.mxu0 0.0
    %463 = vmatpush1.msra.mxu0 0.0
    %464 = vmatprep.subr.mxu0 0.0
    %465 = vmatpush1.msra.mxu0 0.0
    %466 = vmatprep.subr.mxu0 0.0
    %467 = vmatpush1.msra.mxu0 0.0
    %468 = vmatprep.subr.mxu0 0.0
    %469 = vmatpush1.msra.mxu0 0.0
    %470 = vmatprep.subr.mxu0 0.0
    %471 = vmatpush1.msra.mxu0 0.0
    %472 = vmatprep.subr.mxu0 0.0
    %473 = vmatpush1.msra.mxu0 0.0
    %474 = vmatprep.subr.mxu0 0.0
    %475 = vmatpush1.msra.mxu0 0.0
    %476 = vmatprep.subr.mxu0 0.0
    %477 = vmatpush1.msra.mxu0 0.0
    %478 = vmatprep.subr.mxu0 0.0
    %479 = vmatpush1.msra.mxu0 0.0
    %480 = vmatprep.subr.mxu0 0.0
    %481 = vmatpush1.msra.mxu0 0.0
    %482 = vmatprep.subr.mxu0 0.0
    %483 = vmatpush1.msra.mxu0 0.0
    %484 = vmatprep.subr.mxu0 0.0
    %485 = vmatpush1.msra.mxu0 0.0
    %486 = vmatprep.subr.mxu0 0.0
    %v487 = vand.u32 %v110, 4294901760
    %v488 = vsub.f32 %v110, %v487
    %v489 = vand.u32 %v488, 4294901760
    %490 = vmatpush1.msra.mxu0 %v489
    %491 = vmatprep.subr.mxu0 0.0
    %v492 = vand.u32 %v109, 4294901760
    %v493 = vsub.f32 %v109, %v492
    %v494 = vand.u32 %v493, 4294901760
    %495 = vmatpush1.msra.mxu0 %v494
    %496 = vmatprep.subr.mxu0 0.0
    %497 = vmatpush2.msra.mxu0 0.0
    %498 = vmatprep.subr.mxu0 0.0
    %499 = vmatpush2.msra.mxu0 0.0
    %500 = vmatprep.subr.mxu0 0.0
    %501 = vmatpush2.msra.mxu0 0.0
    %502 = vmatprep.subr.mxu0 0.0
    %503 = vmatpush2.msra.mxu0 0.0
    %504 = vmatprep.subr.mxu0 0.0
    %505 = vmatpush2.msra.mxu0 0.0
    %506 = vmatprep.subr.mxu0 0.0
    %507 = vmatpush2.msra.mxu0 0.0
    %508 = vmatprep.subr.mxu0 0.0
    %509 = vmatpush2.msra.mxu0 0.0
    %510 = vmatprep.subr.mxu0 0.0
    %511 = vmatpush2.msra.mxu0 0.0
    %512 = vmatprep.subr.mxu0 0.0
    %513 = vmatpush2.msra.mxu0 0.0
    %514 = vmatprep.subr.mxu0 0.0
    %515 = vmatpush2.msra.mxu0 0.0
    %516 = vmatprep.subr.mxu0 0.0
    %517 = vmatpush2.msra.mxu0 0.0
    %518 = vmatprep.subr.mxu0 0.0
    %519 = vmatpush2.msra.mxu0 0.0
    %520 = vmatprep.subr.mxu0 0.0
    %521 = vmatpush2.msra.mxu0 0.0
    %522 = vmatprep.subr.mxu0 0.0
    %523 = vmatpush2.msra.mxu0 0.0
    %524 = vmatprep.subr.mxu0 0.0
    %525 = vmatpush2.msra.mxu0 0.0
    %526 = vmatprep.subr.mxu0 0.0
    %527 = vmatpush2.msra.mxu0 0.0
    %528 = vmatprep.mubr.f32.mxu0 0.0
    %v529 = vand.u32 %v113, 4294901760
    %530 = vmatmul.mubr.f32.gmra.mxu0 %v529
    %v531 = vpop.f32.mrf.mxu0
    %v532 = vadd.f32 %v447, %v531
    %v533 = vpop.f32.mrf.mxu0
    %534 = vmatprep.mubr.f32.mxu0 0.0
    %v535 = vand.u32 %v116, 4294901760
    %536 = vmatmul.mubr.f32.gmra.mxu0 %v535
    %v537 = vpop.f32.mrf.mxu0
    %v538 = vadd.f32 %v455, %v537
    %v539 = vpop.f32.mrf.mxu0
    %540 = vdwg.mxu0
    %541 = vmatprep.subr.mxu0 0.0
    %542 = vmatpush1.msra.mxu0 0.0
    %543 = vmatprep.subr.mxu0 0.0
    %544 = vmatpush1.msra.mxu0 0.0
    %545 = vmatprep.subr.mxu0 0.0
    %546 = vmatpush1.msra.mxu0 0.0
    %547 = vmatprep.subr.mxu0 0.0
    %548 = vmatpush1.msra.mxu0 0.0
    %549 = vmatprep.subr.mxu0 0.0
    %550 = vmatpush1.msra.mxu0 0.0
    %551 = vmatprep.subr.mxu0 0.0
    %552 = vmatpush1.msra.mxu0 0.0
    %553 = vmatprep.subr.mxu0 0.0
    %554 = vmatpush1.msra.mxu0 0.0
    %555 = vmatprep.subr.mxu0 0.0
    %556 = vmatpush1.msra.mxu0 0.0
    %557 = vmatprep.subr.mxu0 0.0
    %558 = vmatpush1.msra.mxu0 0.0
    %559 = vmatprep.subr.mxu0 0.0
    %560 = vmatpush1.msra.mxu0 0.0
    %561 = vmatprep.subr.mxu0 0.0
    %562 = vmatpush1.msra.mxu0 0.0
    %563 = vmatprep.subr.mxu0 0.0
    %564 = vmatpush1.msra.mxu0 0.0
    %565 = vmatprep.subr.mxu0 0.0
    %566 = vmatpush1.msra.mxu0 0.0
    %567 = vmatprep.subr.mxu0 0.0
    %568 = vmatpush1.msra.mxu0 0.0
    %569 = vmatprep.subr.mxu0 0.0
    %v570 = vand.u32 %v110, 4294901760
    %571 = vmatpush1.msra.mxu0 %v570
    %572 = vmatprep.subr.mxu0 0.0
    %v573 = vand.u32 %v109, 4294901760
    %574 = vmatpush1.msra.mxu0 %v573
    %575 = vmatprep.subr.mxu0 0.0
    %576 = vmatpush2.msra.mxu0 0.0
    %577 = vmatprep.subr.mxu0 0.0
    %578 = vmatpush2.msra.mxu0 0.0
    %579 = vmatprep.subr.mxu0 0.0
    %580 = vmatpush2.msra.mxu0 0.0
    %581 = vmatprep.subr.mxu0 0.0
    %582 = vmatpush2.msra.mxu0 0.0
    %583 = vmatprep.subr.mxu0 0.0
    %584 = vmatpush2.msra.mxu0 0.0
    %585 = vmatprep.subr.mxu0 0.0
    %586 = vmatpush2.msra.mxu0 0.0
    %587 = vmatprep.subr.mxu0 0.0
    %588 = vmatpush2.msra.mxu0 0.0
    %589 = vmatprep.subr.mxu0 0.0
    %590 = vmatpush2.msra.mxu0 0.0
    %591 = vmatprep.subr.mxu0 0.0
    %592 = vmatpush2.msra.mxu0 0.0
    %593 = vmatprep.subr.mxu0 0.0
    %594 = vmatpush2.msra.mxu0 0.0
    %595 = vmatprep.subr.mxu0 0.0
    %596 = vmatpush2.msra.mxu0 0.0
    %597 = vmatprep.subr.mxu0 0.0
    %598 = vmatpush2.msra.mxu0 0.0
    %599 = vmatprep.subr.mxu0 0.0
    %600 = vmatpush2.msra.mxu0 0.0
    %601 = vmatprep.subr.mxu0 0.0
    %602 = vmatpush2.msra.mxu0 0.0
    %603 = vmatprep.subr.mxu0 0.0
    %604 = vmatpush2.msra.mxu0 0.0
    %605 = vmatprep.subr.mxu0 0.0
    %606 = vmatpush2.msra.mxu0 0.0
    %607 = vmatprep.mubr.f32.mxu0 0.0
    %v608 = vand.u32 %v113, 4294901760
    %609 = vmatmul.mubr.f32.gmra.mxu0 %v608
    %v610 = vpop.f32.mrf.mxu0
    %v611 = vadd.f32 %v532, %v610
    %v612 = vpop.f32.mrf.mxu0
    %613 = vmatprep.mubr.f32.mxu0 0.0
    %v614 = vand.u32 %v116, 4294901760
    %615 = vmatmul.mubr.f32.gmra.mxu0 %v614
    %v616 = vpop.f32.mrf.mxu0
    %v617 = vadd.f32 %v538, %v616
    %v618 = vpop.f32.mrf.mxu0
    %619 = vdwg.mxu0
    %620 = vst [vmem:[#allocation2] sm:$0xff] %v611
    %621 = vst [vmem:[#allocation2 + $0x8] sm:$0xff] %v617
    %v622 = vld [vmem:[#allocation11] sm:$0xff]
    %v623 = vld [vmem:[#allocation11 + $0x8] sm:$0xff]
    %v624 = vld [vmem:[#allocation2] sm:$0x1]
    %s625 = sld [smem:[#allocation13]]
    %v626 = vstv %s625
    %v627 = vadd.f32 %v624, %v626
    %v628 = vtanh.pop %v627
    %v629 = vmul.f32 %v628, %v628
    %v630 = vsub.f32 1.0, %v629
    %s631 = sld [smem:[#allocation14]]
    %v632 = vstv %s631
    %v633 = vmul.f32 %v630, %v632
    %v634 = vadd.f32 %v633, 1.0
    %v635 = vand.u32 2147483647, %v634
    %v636 = vadd.f32 %v635, 1e-09
    %v637 = vlog2.pop %v636
    %v638 = vmul.f32 %v637, 0.6931472
    %639 = vst [vmem:[#allocation17] sm:$0x1] %v638
    %640 = vst [vmem:[#allocation3] sm:$0x1] %v628
    %v641 = vld [vmem:[#allocation2] sm:$0xff]
    %v642 = vld [vmem:[#allocation2 + $0x8] sm:$0xff]
    %644 = vset.pattern.permute.xlu0 0
    %645 = vperm.xlu0 %644, %v622
    %v646 = vpop.permute.xlu0 %645
    %649 = vset.pattern.permute.xlu0 0
    %650 = vperm.xlu0 %649, %v623
    %v651 = vpop.permute.xlu0 %650
    %v653 = vlaneseq
    %v654 = vshrl.u32 %v653, 7
    %v655 = vsub.s32 0, %v654
    %v656 = vrot.slane %v628, %v655
    %v657 = vmul.f32 %v646, %v656
    %v658 = vmul.f32 %v651, %v656
    %v659 = vadd.f32 %v641, %v657
    %v660 = vadd.f32 %v642, %v658
    %661 = vst [vmem:[#allocation2] sm:$0xff] %v659
    %662 = vst [vmem:[#allocation2 + $0x8] sm:$0xff] %v660
    %v663 = vld [vmem:[#allocation2 + $0x1] sm:$0x1]
    %s664 = sld [smem:[#allocation13 + $0x1]]
    %v665 = vstv %s664
    %v666 = vadd.f32 %v663, %v665
    %v667 = vtanh.pop %v666
    %v668 = vmul.f32 %v667, %v667
    %v669 = vsub.f32 1.0, %v668
    %s670 = sld [smem:[#allocation14 + $0x1]]
    %v671 = vstv %s670
    %v672 = vmul.f32 %v669, %v671
    %v673 = vadd.f32 %v672, 1.0
    %v674 = vand.u32 2147483647, %v673
    %v675 = vadd.f32 %v674, 1e-09
    %v676 = vlog2.pop %v675
    %v677 = vmul.f32 %v676, 0.6931472
    %678 = vst [vmem:[#allocation17 + $0x1] sm:$0x1] %v677
    %679 = vst [vmem:[#allocation3 + $0x1] sm:$0x1] %v667
    %v680 = vld [vmem:[#allocation2] sm:$0xff]
    %v681 = vld [vmem:[#allocation2 + $0x8] sm:$0xff]
    %682 = vset.pattern.permute.xlu0 1
    %683 = vperm.xlu0 %682, %v622
    %v684 = vpop.permute.xlu0 %683
    %686 = vset.pattern.permute.xlu0 1
    %687 = vperm.xlu0 %686, %v623
    %v688 = vpop.permute.xlu0 %687
    %v690 = vlaneseq
    %v691 = vshrl.u32 %v690, 7
    %v692 = vsub.s32 0, %v691
    %v693 = vrot.slane %v667, %v692
    %v694 = vmul.f32 %v684, %v693
    %v695 = vmul.f32 %v688, %v693
    %v696 = vadd.f32 %v680, %v694
    %v697 = vadd.f32 %v681, %v695
    %698 = vst [vmem:[#allocation2] sm:$0xff] %v696
    %699 = vst [vmem:[#allocation2 + $0x8] sm:$0xff] %v697
    %v700 = vld [vmem:[#allocation2 + $0x2] sm:$0x1]
    %s701 = sld [smem:[#allocation13 + $0x2]]
    %v702 = vstv %s701
    %v703 = vadd.f32 %v700, %v702
    %v704 = vtanh.pop %v703
    %v705 = vmul.f32 %v704, %v704
    %v706 = vsub.f32 1.0, %v705
    %s707 = sld [smem:[#allocation14 + $0x2]]
    %v708 = vstv %s707
    %v709 = vmul.f32 %v706, %v708
    %v710 = vadd.f32 %v709, 1.0
    %v711 = vand.u32 2147483647, %v710
    %v712 = vadd.f32 %v711, 1e-09
    %v713 = vlog2.pop %v712
    %v714 = vmul.f32 %v713, 0.6931472
    %715 = vst [vmem:[#allocation17 + $0x2] sm:$0x1] %v714
    %716 = vst [vmem:[#allocation3 + $0x2] sm:$0x1] %v704
    %v717 = vld [vmem:[#allocation2] sm:$0xff]
    %v718 = vld [vmem:[#allocation2 + $0x8] sm:$0xff]
    %719 = vset.pattern.permute.xlu0 2
    %720 = vperm.xlu0 %719, %v622
    %v721 = vpop.permute.xlu0 %720
    %723 = vset.pattern.permute.xlu0 2
    %724 = vperm.xlu0 %723, %v623
    %v725 = vpop.permute.xlu0 %724
    %v727 = vlaneseq
    %v728 = vshrl.u32 %v727, 7
    %v729 = vsub.s32 0, %v728
    %v730 = vrot.slane %v704, %v729
    %v731 = vmul.f32 %v721, %v730
    %v732 = vmul.f32 %v725, %v730
    %v733 = vadd.f32 %v717, %v731
    %v734 = vadd.f32 %v718, %v732
    %735 = vst [vmem:[#allocation2] sm:$0xff] %v733
    %736 = vst [vmem:[#allocation2 + $0x8] sm:$0xff] %v734
    %v737 = vld [vmem:[#allocation2 + $0x3] sm:$0x1]
    %s738 = sld [smem:[#allocation13 + $0x3]]
    %v739 = vstv %s738
    %v740 = vadd.f32 %v737, %v739
    %v741 = vtanh.pop %v740
    %v742 = vmul.f32 %v741, %v741
    %v743 = vsub.f32 1.0, %v742
    %s744 = sld [smem:[#allocation14 + $0x3]]
    %v745 = vstv %s744
    %v746 = vmul.f32 %v743, %v745
    %v747 = vadd.f32 %v746, 1.0
    %v748 = vand.u32 2147483647, %v747
    %v749 = vadd.f32 %v748, 1e-09
    %v750 = vlog2.pop %v749
    %v751 = vmul.f32 %v750, 0.6931472
    %752 = vst [vmem:[#allocation17 + $0x3] sm:$0x1] %v751
    %753 = vst [vmem:[#allocation3 + $0x3] sm:$0x1] %v741
    %v754 = vld [vmem:[#allocation2] sm:$0xff]
    %v755 = vld [vmem:[#allocation2 + $0x8] sm:$0xff]
    %756 = vset.pattern.permute.xlu0 3
    %757 = vperm.xlu0 %756, %v622
    %v758 = vpop.permute.xlu0 %757
    %760 = vset.pattern.permute.xlu0 3
    %761 = vperm.xlu0 %760, %v623
    %v762 = vpop.permute.xlu0 %761
    %v764 = vlaneseq
    %v765 = vshrl.u32 %v764, 7
    %v766 = vsub.s32 0, %v765
    %v767 = vrot.slane %v741, %v766
    %v768 = vmul.f32 %v758, %v767
    %v769 = vmul.f32 %v762, %v767
    %v770 = vadd.f32 %v754, %v768
    %v771 = vadd.f32 %v755, %v769
    %772 = vst [vmem:[#allocation2] sm:$0xff] %v770
    %773 = vst [vmem:[#allocation2 + $0x8] sm:$0xff] %v771
    %v774 = vld [vmem:[#allocation2 + $0x4] sm:$0x1]
    %s775 = sld [smem:[#allocation13 + $0x4]]
    %v776 = vstv %s775
    %v777 = vadd.f32 %v774, %v776
    %v778 = vtanh.pop %v777
    %v779 = vmul.f32 %v778, %v778
    %v780 = vsub.f32 1.0, %v779
    %s781 = sld [smem:[#allocation14 + $0x4]]
    %v782 = vstv %s781
    %v783 = vmul.f32 %v780, %v782
    %v784 = vadd.f32 %v783, 1.0
    %v785 = vand.u32 2147483647, %v784
    %v786 = vadd.f32 %v785, 1e-09
    %v787 = vlog2.pop %v786
    %v788 = vmul.f32 %v787, 0.6931472
    %789 = vst [vmem:[#allocation17 + $0x4] sm:$0x1] %v788
    %790 = vst [vmem:[#allocation3 + $0x4] sm:$0x1] %v778
    %v791 = vld [vmem:[#allocation2] sm:$0xff]
    %v792 = vld [vmem:[#allocation2 + $0x8] sm:$0xff]
    %793 = vset.pattern.permute.xlu0 4
    %794 = vperm.xlu0 %793, %v622
    %v795 = vpop.permute.xlu0 %794
    %797 = vset.pattern.permute.xlu0 4
    %798 = vperm.xlu0 %797, %v623
    %v799 = vpop.permute.xlu0 %798
    %v801 = vlaneseq
    %v802 = vshrl.u32 %v801, 7
    %v803 = vsub.s32 0, %v802
    %v804 = vrot.slane %v778, %v803
    %v805 = vmul.f32 %v795, %v804
    %v806 = vmul.f32 %v799, %v804
    %v807 = vadd.f32 %v791, %v805
    %v808 = vadd.f32 %v792, %v806
    %809 = vst [vmem:[#allocation2] sm:$0xff] %v807
    %810 = vst [vmem:[#allocation2 + $0x8] sm:$0xff] %v808
    %v811 = vld [vmem:[#allocation2 + $0x5] sm:$0x1]
    %s812 = sld [smem:[#allocation13 + $0x5]]
    %v813 = vstv %s812
    %v814 = vadd.f32 %v811, %v813
    %v815 = vtanh.pop %v814
    %v816 = vmul.f32 %v815, %v815
    %v817 = vsub.f32 1.0, %v816
    %s818 = sld [smem:[#allocation14 + $0x5]]
    %v819 = vstv %s818
    %v820 = vmul.f32 %v817, %v819
    %v821 = vadd.f32 %v820, 1.0
    %v822 = vand.u32 2147483647, %v821
    %v823 = vadd.f32 %v822, 1e-09
    %v824 = vlog2.pop %v823
    %v825 = vmul.f32 %v824, 0.6931472
    %826 = vst [vmem:[#allocation17 + $0x5] sm:$0x1] %v825
    %827 = vst [vmem:[#allocation3 + $0x5] sm:$0x1] %v815
    %v828 = vld [vmem:[#allocation2] sm:$0xff]
    %v829 = vld [vmem:[#allocation2 + $0x8] sm:$0xff]
    %830 = vset.pattern.permute.xlu0 5
    %831 = vperm.xlu0 %830, %v622
    %v832 = vpop.permute.xlu0 %831
    %834 = vset.pattern.permute.xlu0 5
    %835 = vperm.xlu0 %834, %v623
    %v836 = vpop.permute.xlu0 %835
    %v838 = vlaneseq
    %v839 = vshrl.u32 %v838, 7
    %v840 = vsub.s32 0, %v839
    %v841 = vrot.slane %v815, %v840
    %v842 = vmul.f32 %v832, %v841
    %v843 = vmul.f32 %v836, %v841
    %v844 = vadd.f32 %v828, %v842
    %v845 = vadd.f32 %v829, %v843
    %846 = vst [vmem:[#allocation2] sm:$0xff] %v844
    %847 = vst [vmem:[#allocation2 + $0x8] sm:$0xff] %v845
    %v848 = vld [vmem:[#allocation2 + $0x6] sm:$0x1]
    %s849 = sld [smem:[#allocation13 + $0x6]]
    %v850 = vstv %s849
    %v851 = vadd.f32 %v848, %v850
    %v852 = vtanh.pop %v851
    %v853 = vmul.f32 %v852, %v852
    %v854 = vsub.f32 1.0, %v853
    %s855 = sld [smem:[#allocation14 + $0x6]]
    %v856 = vstv %s855
    %v857 = vmul.f32 %v854, %v856
    %v858 = vadd.f32 %v857, 1.0
    %v859 = vand.u32 2147483647, %v858
    %v860 = vadd.f32 %v859, 1e-09
    %v861 = vlog2.pop %v860
    %v862 = vmul.f32 %v861, 0.6931472
    %863 = vst [vmem:[#allocation17 + $0x6] sm:$0x1] %v862
    %864 = vst [vmem:[#allocation3 + $0x6] sm:$0x1] %v852
    %v865 = vld [vmem:[#allocation2] sm:$0xff]
    %v866 = vld [vmem:[#allocation2 + $0x8] sm:$0xff]
    %867 = vset.pattern.permute.xlu0 6
    %868 = vperm.xlu0 %867, %v622
    %v869 = vpop.permute.xlu0 %868
    %871 = vset.pattern.permute.xlu0 6
    %872 = vperm.xlu0 %871, %v623
    %v873 = vpop.permute.xlu0 %872
    %v875 = vlaneseq
    %v876 = vshrl.u32 %v875, 7
    %v877 = vsub.s32 0, %v876
    %v878 = vrot.slane %v852, %v877
    %v879 = vmul.f32 %v869, %v878
    %v880 = vmul.f32 %v873, %v878
    %v881 = vadd.f32 %v865, %v879
    %v882 = vadd.f32 %v866, %v880
    %883 = vst [vmem:[#allocation2] sm:$0xff] %v881
    %884 = vst [vmem:[#allocation2 + $0x8] sm:$0xff] %v882
    %v885 = vld [vmem:[#allocation2 + $0x7] sm:$0x1]
    %s886 = sld [smem:[#allocation13 + $0x7]]
    %v887 = vstv %s886
    %v888 = vadd.f32 %v885, %v887
    %v889 = vtanh.pop %v888
    %v890 = vmul.f32 %v889, %v889
    %v891 = vsub.f32 1.0, %v890
    %s892 = sld [smem:[#allocation14 + $0x7]]
    %v893 = vstv %s892
    %v894 = vmul.f32 %v891, %v893
    %v895 = vadd.f32 %v894, 1.0
    %v896 = vand.u32 2147483647, %v895
    %v897 = vadd.f32 %v896, 1e-09
    %v898 = vlog2.pop %v897
    %v899 = vmul.f32 %v898, 0.6931472
    %900 = vst [vmem:[#allocation17 + $0x7] sm:$0x1] %v899
    %901 = vst [vmem:[#allocation3 + $0x7] sm:$0x1] %v889
    %v902 = vld [vmem:[#allocation2] sm:$0xff]
    %v903 = vld [vmem:[#allocation2 + $0x8] sm:$0xff]
    %904 = vset.pattern.permute.xlu0 7
    %905 = vperm.xlu0 %904, %v622
    %v906 = vpop.permute.xlu0 %905
    %908 = vset.pattern.permute.xlu0 7
    %909 = vperm.xlu0 %908, %v623
    %v910 = vpop.permute.xlu0 %909
    %v912 = vlaneseq
    %v913 = vshrl.u32 %v912, 7
    %v914 = vsub.s32 0, %v913
    %v915 = vrot.slane %v889, %v914
    %v916 = vmul.f32 %v906, %v915
    %v917 = vmul.f32 %v910, %v915
    %v918 = vadd.f32 %v902, %v916
    %v919 = vadd.f32 %v903, %v917
    %920 = vst [vmem:[#allocation2] sm:$0xff] %v918
    %921 = vst [vmem:[#allocation2 + $0x8] sm:$0xff] %v919
    %v922 = vld [vmem:[#allocation2 + $0x8] sm:$0x1]
    %s923 = sld [smem:[#allocation13 + $0x8]]
    %v924 = vstv %s923
    %v925 = vadd.f32 %v922, %v924
    %v926 = vtanh.pop %v925
    %v927 = vmul.f32 %v926, %v926
    %v928 = vsub.f32 1.0, %v927
    %s929 = sld [smem:[#allocation14 + $0x8]]
    %v930 = vstv %s929
    %v931 = vmul.f32 %v928, %v930
    %v932 = vadd.f32 %v931, 1.0
    %v933 = vand.u32 2147483647, %v932
    %v934 = vadd.f32 %v933, 1e-09
    %v935 = vlog2.pop %v934
    %v936 = vmul.f32 %v935, 0.6931472
    %937 = vst [vmem:[#allocation17 + $0x8] sm:$0x1] %v936
    %938 = vst [vmem:[#allocation3 + $0x8] sm:$0x1] %v926
    %v939 = vld [vmem:[#allocation2] sm:$0xff]
    %v940 = vld [vmem:[#allocation2 + $0x8] sm:$0xff]
    %941 = vset.pattern.permute.xlu0 8
    %942 = vperm.xlu0 %941, %v622
    %v943 = vpop.permute.xlu0 %942
    %945 = vset.pattern.permute.xlu0 8
    %946 = vperm.xlu0 %945, %v623
    %v947 = vpop.permute.xlu0 %946
    %v949 = vlaneseq
    %v950 = vshrl.u32 %v949, 7
    %v951 = vsub.s32 0, %v950
    %v952 = vrot.slane %v926, %v951
    %v953 = vmul.f32 %v943, %v952
    %v954 = vmul.f32 %v947, %v952
    %v955 = vadd.f32 %v939, %v953
    %v956 = vadd.f32 %v940, %v954
    %957 = vst [vmem:[#allocation2] sm:$0xff] %v955
    %958 = vst [vmem:[#allocation2 + $0x8] sm:$0xff] %v956
    %v959 = vld [vmem:[#allocation2 + $0x9] sm:$0x1]
    %s960 = sld [smem:[#allocation13 + $0x9]]
    %v961 = vstv %s960
    %v962 = vadd.f32 %v959, %v961
    %v963 = vtanh.pop %v962
    %v964 = vmul.f32 %v963, %v963
    %v965 = vsub.f32 1.0, %v964
    %s966 = sld [smem:[#allocation14 + $0x9]]
    %v967 = vstv %s966
    %v968 = vmul.f32 %v965, %v967
    %v969 = vadd.f32 %v968, 1.0
    %v970 = vand.u32 2147483647, %v969
    %v971 = vadd.f32 %v970, 1e-09
    %v972 = vlog2.pop %v971
    %v973 = vmul.f32 %v972, 0.6931472
    %974 = vst [vmem:[#allocation17 + $0x9] sm:$0x1] %v973
    %975 = vst [vmem:[#allocation3 + $0x9] sm:$0x1] %v963
    %v976 = vld [vmem:[#allocation2] sm:$0xff]
    %v977 = vld [vmem:[#allocation2 + $0x8] sm:$0xff]
    %978 = vset.pattern.permute.xlu0 9
    %979 = vperm.xlu0 %978, %v622
    %v980 = vpop.permute.xlu0 %979
    %982 = vset.pattern.permute.xlu0 9
    %983 = vperm.xlu0 %982, %v623
    %v984 = vpop.permute.xlu0 %983
    %v986 = vlaneseq
    %v987 = vshrl.u32 %v986, 7
    %v988 = vsub.s32 0, %v987
    %v989 = vrot.slane %v963, %v988
    %v990 = vmul.f32 %v980, %v989
    %v991 = vmul.f32 %v984, %v989
    %v992 = vadd.f32 %v976, %v990
    %v993 = vadd.f32 %v977, %v991
    %994 = vst [vmem:[#allocation2] sm:$0xff] %v992
    %995 = vst [vmem:[#allocation2 + $0x8] sm:$0xff] %v993
    %v996 = vld [vmem:[#allocation2 + $0xa] sm:$0x1]
    %s997 = sld [smem:[#allocation13 + $0xa]]
    %v998 = vstv %s997
    %v999 = vadd.f32 %v996, %v998
    %v1000 = vtanh.pop %v999
    %v1001 = vmul.f32 %v1000, %v1000
    %v1002 = vsub.f32 1.0, %v1001
    %s1003 = sld [smem:[#allocation14 + $0xa]]
    %v1004 = vstv %s1003
    %v1005 = vmul.f32 %v1002, %v1004
    %v1006 = vadd.f32 %v1005, 1.0
    %v1007 = vand.u32 2147483647, %v1006
    %v1008 = vadd.f32 %v1007, 1e-09
    %v1009 = vlog2.pop %v1008
    %v1010 = vmul.f32 %v1009, 0.6931472
    %1011 = vst [vmem:[#allocation17 + $0xa] sm:$0x1] %v1010
    %1012 = vst [vmem:[#allocation3 + $0xa] sm:$0x1] %v1000
    %v1013 = vld [vmem:[#allocation2] sm:$0xff]
    %v1014 = vld [vmem:[#allocation2 + $0x8] sm:$0xff]
    %1015 = vset.pattern.permute.xlu0 10
    %1016 = vperm.xlu0 %1015, %v622
    %v1017 = vpop.permute.xlu0 %1016
    %1019 = vset.pattern.permute.xlu0 10
    %1020 = vperm.xlu0 %1019, %v623
    %v1021 = vpop.permute.xlu0 %1020
    %v1023 = vlaneseq
    %v1024 = vshrl.u32 %v1023, 7
    %v1025 = vsub.s32 0, %v1024
    %v1026 = vrot.slane %v1000, %v1025
    %v1027 = vmul.f32 %v1017, %v1026
    %v1028 = vmul.f32 %v1021, %v1026
    %v1029 = vadd.f32 %v1013, %v1027
    %v1030 = vadd.f32 %v1014, %v1028
    %1031 = vst [vmem:[#allocation2] sm:$0xff] %v1029
    %1032 = vst [vmem:[#allocation2 + $0x8] sm:$0xff] %v1030
    %v1033 = vld [vmem:[#allocation2 + $0xb] sm:$0x1]
    %s1034 = sld [smem:[#allocation13 + $0xb]]
    %v1035 = vstv %s1034
    %v1036 = vadd.f32 %v1033, %v1035
    %v1037 = vtanh.pop %v1036
    %v1038 = vmul.f32 %v1037, %v1037
    %v1039 = vsub.f32 1.0, %v1038
    %s1040 = sld [smem:[#allocation14 + $0xb]]
    %v1041 = vstv %s1040
    %v1042 = vmul.f32 %v1039, %v1041
    %v1043 = vadd.f32 %v1042, 1.0
    %v1044 = vand.u32 2147483647, %v1043
    %v1045 = vadd.f32 %v1044, 1e-09
    %v1046 = vlog2.pop %v1045
    %v1047 = vmul.f32 %v1046, 0.6931472
    %1048 = vst [vmem:[#allocation17 + $0xb] sm:$0x1] %v1047
    %1049 = vst [vmem:[#allocation3 + $0xb] sm:$0x1] %v1037
    %v1050 = vld [vmem:[#allocation2] sm:$0xff]
    %v1051 = vld [vmem:[#allocation2 + $0x8] sm:$0xff]
    %1052 = vset.pattern.permute.xlu0 11
    %1053 = vperm.xlu0 %1052, %v622
    %v1054 = vpop.permute.xlu0 %1053
    %1056 = vset.pattern.permute.xlu0 11
    %1057 = vperm.xlu0 %1056, %v623
    %v1058 = vpop.permute.xlu0 %1057
    %v1060 = vlaneseq
    %v1061 = vshrl.u32 %v1060, 7
    %v1062 = vsub.s32 0, %v1061
    %v1063 = vrot.slane %v1037, %v1062
    %v1064 = vmul.f32 %v1054, %v1063
    %v1065 = vmul.f32 %v1058, %v1063
    %v1066 = vadd.f32 %v1050, %v1064
    %v1067 = vadd.f32 %v1051, %v1065
    %1068 = vst [vmem:[#allocation2] sm:$0xff] %v1066
    %1069 = vst [vmem:[#allocation2 + $0x8] sm:$0xff] %v1067
    %v1070 = vld [vmem:[#allocation2 + $0xc] sm:$0x1]
    %s1071 = sld [smem:[#allocation13 + $0xc]]
    %v1072 = vstv %s1071
    %v1073 = vadd.f32 %v1070, %v1072
    %v1074 = vtanh.pop %v1073
    %v1075 = vmul.f32 %v1074, %v1074
    %v1076 = vsub.f32 1.0, %v1075
    %s1077 = sld [smem:[#allocation14 + $0xc]]
    %v1078 = vstv %s1077
    %v1079 = vmul.f32 %v1076, %v1078
    %v1080 = vadd.f32 %v1079, 1.0
    %v1081 = vand.u32 2147483647, %v1080
    %v1082 = vadd.f32 %v1081, 1e-09
    %v1083 = vlog2.pop %v1082
    %v1084 = vmul.f32 %v1083, 0.6931472
    %1085 = vst [vmem:[#allocation17 + $0xc] sm:$0x1] %v1084
    %1086 = vst [vmem:[#allocation3 + $0xc] sm:$0x1] %v1074
    %v1087 = vld [vmem:[#allocation2] sm:$0xff]
    %v1088 = vld [vmem:[#allocation2 + $0x8] sm:$0xff]
    %1089 = vset.pattern.permute.xlu0 12
    %1090 = vperm.xlu0 %1089, %v622
    %v1091 = vpop.permute.xlu0 %1090
    %1093 = vset.pattern.permute.xlu0 12
    %1094 = vperm.xlu0 %1093, %v623
    %v1095 = vpop.permute.xlu0 %1094
    %v1097 = vlaneseq
    %v1098 = vshrl.u32 %v1097, 7
    %v1099 = vsub.s32 0, %v1098
    %v1100 = vrot.slane %v1074, %v1099
    %v1101 = vmul.f32 %v1091, %v1100
    %v1102 = vmul.f32 %v1095, %v1100
    %v1103 = vadd.f32 %v1087, %v1101
    %v1104 = vadd.f32 %v1088, %v1102
    %1105 = vst [vmem:[#allocation2] sm:$0xff] %v1103
    %1106 = vst [vmem:[#allocation2 + $0x8] sm:$0xff] %v1104
    %v1107 = vld [vmem:[#allocation2 + $0xd] sm:$0x1]
    %s1108 = sld [smem:[#allocation13 + $0xd]]
    %v1109 = vstv %s1108
    %v1110 = vadd.f32 %v1107, %v1109
    %v1111 = vtanh.pop %v1110
    %v1112 = vmul.f32 %v1111, %v1111
    %v1113 = vsub.f32 1.0, %v1112
    %s1114 = sld [smem:[#allocation14 + $0xd]]
    %v1115 = vstv %s1114
    %v1116 = vmul.f32 %v1113, %v1115
    %v1117 = vadd.f32 %v1116, 1.0
    %v1118 = vand.u32 2147483647, %v1117
    %v1119 = vadd.f32 %v1118, 1e-09
    %v1120 = vlog2.pop %v1119
    %v1121 = vmul.f32 %v1120, 0.6931472
    %1122 = vst [vmem:[#allocation17 + $0xd] sm:$0x1] %v1121
    %1123 = vst [vmem:[#allocation3 + $0xd] sm:$0x1] %v1111
    %v1124 = vld [vmem:[#allocation2] sm:$0xff]
    %v1125 = vld [vmem:[#allocation2 + $0x8] sm:$0xff]
    %1126 = vset.pattern.permute.xlu0 13
    %1127 = vperm.xlu0 %1126, %v622
    %v1128 = vpop.permute.xlu0 %1127
    %1130 = vset.pattern.permute.xlu0 13
    %1131 = vperm.xlu0 %1130, %v623
    %v1132 = vpop.permute.xlu0 %1131
    %v1134 = vlaneseq
    %v1135 = vshrl.u32 %v1134, 7
    %v1136 = vsub.s32 0, %v1135
    %v1137 = vrot.slane %v1111, %v1136
    %v1138 = vmul.f32 %v1128, %v1137
    %v1139 = vmul.f32 %v1132, %v1137
    %v1140 = vadd.f32 %v1124, %v1138
    %v1141 = vadd.f32 %v1125, %v1139
    %1142 = vst [vmem:[#allocation2] sm:$0xff] %v1140
    %1143 = vst [vmem:[#allocation2 + $0x8] sm:$0xff] %v1141
    %v1144 = vld [vmem:[#allocation2 + $0xe] sm:$0x1]
    %s1145 = sld [smem:[#allocation13 + $0xe]]
    %v1146 = vstv %s1145
    %v1147 = vadd.f32 %v1144, %v1146
    %v1148 = vtanh.pop %v1147
    %v1149 = vmul.f32 %v1148, %v1148
    %v1150 = vsub.f32 1.0, %v1149
    %s1151 = sld [smem:[#allocation14 + $0xe]]
    %v1152 = vstv %s1151
    %v1153 = vmul.f32 %v1150, %v1152
    %v1154 = vadd.f32 %v1153, 1.0
    %v1155 = vand.u32 2147483647, %v1154
    %v1156 = vadd.f32 %v1155, 1e-09
    %v1157 = vlog2.pop %v1156
    %v1158 = vmul.f32 %v1157, 0.6931472
    %1159 = vst [vmem:[#allocation17 + $0xe] sm:$0x1] %v1158
    %1160 = vst [vmem:[#allocation3 + $0xe] sm:$0x1] %v1148
    %v1161 = vld [vmem:[#allocation2] sm:$0xff]
    %v1162 = vld [vmem:[#allocation2 + $0x8] sm:$0xff]
    %1163 = vset.pattern.permute.xlu0 14
    %1164 = vperm.xlu0 %1163, %v622
    %v1165 = vpop.permute.xlu0 %1164
    %1167 = vset.pattern.permute.xlu0 14
    %1168 = vperm.xlu0 %1167, %v623
    %v1169 = vpop.permute.xlu0 %1168
    %v1171 = vlaneseq
    %v1172 = vshrl.u32 %v1171, 7
    %v1173 = vsub.s32 0, %v1172
    %v1174 = vrot.slane %v1148, %v1173
    %v1175 = vmul.f32 %v1165, %v1174
    %v1176 = vmul.f32 %v1169, %v1174
    %v1177 = vadd.f32 %v1161, %v1175
    %v1178 = vadd.f32 %v1162, %v1176
    %1179 = vst [vmem:[#allocation2] sm:$0xff] %v1177
    %1180 = vst [vmem:[#allocation2 + $0x8] sm:$0xff] %v1178
    %v1181 = vld [vmem:[#allocation2 + $0xf] sm:$0x1]
    %s1182 = sld [smem:[#allocation13 + $0xf]]
    %v1183 = vstv %s1182
    %v1184 = vadd.f32 %v1181, %v1183
    %v1185 = vtanh.pop %v1184
    %v1186 = vmul.f32 %v1185, %v1185
    %v1187 = vsub.f32 1.0, %v1186
    %s1188 = sld [smem:[#allocation14 + $0xf]]
    %v1189 = vstv %s1188
    %v1190 = vmul.f32 %v1187, %v1189
    %v1191 = vadd.f32 %v1190, 1.0
    %v1192 = vand.u32 2147483647, %v1191
    %v1193 = vadd.f32 %v1192, 1e-09
    %v1194 = vlog2.pop %v1193
    %v1195 = vmul.f32 %v1194, 0.6931472
    %1196 = vst [vmem:[#allocation17 + $0xf] sm:$0x1] %v1195
    %1197 = vst [vmem:[#allocation3 + $0xf] sm:$0x1] %v1185
    %v1198 = vld [vmem:[#allocation4] sm:$0xff]
    %v1199 = vld [vmem:[#allocation4 + $0x8] sm:$0xff]
    %v1200 = vld [vmem:[#allocation10] sm:$0xff]
    %v1201 = vld [vmem:[#allocation10 + $0x8] sm:$0xff]
    %v1202 = vld [vmem:[#allocation3] sm:$0xff]
    %v1203 = vld [vmem:[#allocation3 + $0x8] sm:$0xff]
    %v1205 = vsel %vm111, %v1200, 0
    %v1208 = vsel %vm111, %v1201, 0
    %1210 = vmatprep.subr.mxu0 0.0
    %1211 = vmatpush1.msra.mxu0 0.0
    %1212 = vmatprep.subr.mxu0 0.0
    %1213 = vmatpush1.msra.mxu0 0.0
    %1214 = vmatprep.subr.mxu0 0.0
    %1215 = vmatpush1.msra.mxu0 0.0
    %1216 = vmatprep.subr.mxu0 0.0
    %1217 = vmatpush1.msra.mxu0 0.0
    %1218 = vmatprep.subr.mxu0 0.0
    %1219 = vmatpush1.msra.mxu0 0.0
    %1220 = vmatprep.subr.mxu0 0.0
    %1221 = vmatpush1.msra.mxu0 0.0
    %1222 = vmatprep.subr.mxu0 0.0
    %1223 = vmatpush1.msra.mxu0 0.0
    %1224 = vmatprep.subr.mxu0 0.0
    %1225 = vmatpush1.msra.mxu0 0.0
    %1226 = vmatprep.subr.mxu0 0.0
    %1227 = vmatpush1.msra.mxu0 0.0
    %1228 = vmatprep.subr.mxu0 0.0
    %1229 = vmatpush1.msra.mxu0 0.0
    %1230 = vmatprep.subr.mxu0 0.0
    %1231 = vmatpush1.msra.mxu0 0.0
    %1232 = vmatprep.subr.mxu0 0.0
    %1233 = vmatpush1.msra.mxu0 0.0
    %1234 = vmatprep.subr.mxu0 0.0
    %1235 = vmatpush1.msra.mxu0 0.0
    %1236 = vmatprep.subr.mxu0 0.0
    %1237 = vmatpush1.msra.mxu0 0.0
    %1238 = vmatprep.subr.mxu0 0.0
    %v1239 = vand.u32 %v1203, 4294901760
    %1240 = vmatpush1.msra.mxu0 %v1239
    %1241 = vmatprep.subr.mxu0 0.0
    %v1242 = vand.u32 %v1202, 4294901760
    %1243 = vmatpush1.msra.mxu0 %v1242
    %1244 = vmatprep.subr.mxu0 0.0
    %1245 = vmatpush2.msra.mxu0 0.0
    %1246 = vmatprep.subr.mxu0 0.0
    %1247 = vmatpush2.msra.mxu0 0.0
    %1248 = vmatprep.subr.mxu0 0.0
    %1249 = vmatpush2.msra.mxu0 0.0
    %1250 = vmatprep.subr.mxu0 0.0
    %1251 = vmatpush2.msra.mxu0 0.0
    %1252 = vmatprep.subr.mxu0 0.0
    %1253 = vmatpush2.msra.mxu0 0.0
    %1254 = vmatprep.subr.mxu0 0.0
    %1255 = vmatpush2.msra.mxu0 0.0
    %1256 = vmatprep.subr.mxu0 0.0
    %1257 = vmatpush2.msra.mxu0 0.0
    %1258 = vmatprep.subr.mxu0 0.0
    %1259 = vmatpush2.msra.mxu0 0.0
    %1260 = vmatprep.subr.mxu0 0.0
    %1261 = vmatpush2.msra.mxu0 0.0
    %1262 = vmatprep.subr.mxu0 0.0
    %1263 = vmatpush2.msra.mxu0 0.0
    %1264 = vmatprep.subr.mxu0 0.0
    %1265 = vmatpush2.msra.mxu0 0.0
    %1266 = vmatprep.subr.mxu0 0.0
    %1267 = vmatpush2.msra.mxu0 0.0
    %1268 = vmatprep.subr.mxu0 0.0
    %1269 = vmatpush2.msra.mxu0 0.0
    %1270 = vmatprep.subr.mxu0 0.0
    %1271 = vmatpush2.msra.mxu0 0.0
    %1272 = vmatprep.subr.mxu0 0.0
    %1273 = vmatpush2.msra.mxu0 0.0
    %1274 = vmatprep.subr.mxu0 0.0
    %1275 = vmatpush2.msra.mxu0 0.0
    %1276 = vmatprep.mubr.f32.mxu0 0.0
    %v1277 = vand.u32 %v1205, 4294901760
    %v1278 = vsub.f32 %v1205, %v1277
    %v1279 = vand.u32 %v1278, 4294901760
    %v1280 = vsub.f32 %v1278, %v1279
    %v1281 = vand.u32 %v1280, 4294901760
    %1282 = vmatmul.mubr.f32.gmra.mxu0 %v1281
    %v1283 = vpop.f32.mrf.mxu0
    %v1284 = vadd.f32 0.0, %v1283
    %v1285 = vpop.f32.mrf.mxu0
    %1286 = vmatprep.mubr.f32.mxu0 0.0
    %v1287 = vand.u32 %v1208, 4294901760
    %v1288 = vsub.f32 %v1208, %v1287
    %v1289 = vand.u32 %v1288, 4294901760
    %v1290 = vsub.f32 %v1288, %v1289
    %v1291 = vand.u32 %v1290, 4294901760
    %1292 = vmatmul.mubr.f32.gmra.mxu0 %v1291
    %v1293 = vpop.f32.mrf.mxu0
    %v1294 = vadd.f32 0.0, %v1293
    %v1295 = vpop.f32.mrf.mxu0
    %1296 = vdwg.mxu0
    %1297 = vmatprep.subr.mxu0 0.0
    %1298 = vmatpush1.msra.mxu0 0.0
    %1299 = vmatprep.subr.mxu0 0.0
    %1300 = vmatpush1.msra.mxu0 0.0
    %1301 = vmatprep.subr.mxu0 0.0
    %1302 = vmatpush1.msra.mxu0 0.0
    %1303 = vmatprep.subr.mxu0 0.0
    %1304 = vmatpush1.msra.mxu0 0.0
    %1305 = vmatprep.subr.mxu0 0.0
    %1306 = vmatpush1.msra.mxu0 0.0
    %1307 = vmatprep.subr.mxu0 0.0
    %1308 = vmatpush1.msra.mxu0 0.0
    %1309 = vmatprep.subr.mxu0 0.0
    %1310 = vmatpush1.msra.mxu0 0.0
    %1311 = vmatprep.subr.mxu0 0.0
    %1312 = vmatpush1.msra.mxu0 0.0
    %1313 = vmatprep.subr.mxu0 0.0
    %1314 = vmatpush1.msra.mxu0 0.0
    %1315 = vmatprep.subr.mxu0 0.0
    %1316 = vmatpush1.msra.mxu0 0.0
    %1317 = vmatprep.subr.mxu0 0.0
    %1318 = vmatpush1.msra.mxu0 0.0
    %1319 = vmatprep.subr.mxu0 0.0
    %1320 = vmatpush1.msra.mxu0 0.0
    %1321 = vmatprep.subr.mxu0 0.0
    %1322 = vmatpush1.msra.mxu0 0.0
    %1323 = vmatprep.subr.mxu0 0.0
    %1324 = vmatpush1.msra.mxu0 0.0
    %1325 = vmatprep.subr.mxu0 0.0
    %v1326 = vand.u32 %v1203, 4294901760
    %v1327 = vsub.f32 %v1203, %v1326
    %v1328 = vand.u32 %v1327, 4294901760
    %v1329 = vsub.f32 %v1327, %v1328
    %v1330 = vand.u32 %v1329, 4294901760
    %1331 = vmatpush1.msra.mxu0 %v1330
    %1332 = vmatprep.subr.mxu0 0.0
    %v1333 = vand.u32 %v1202, 4294901760
    %v1334 = vsub.f32 %v1202, %v1333
    %v1335 = vand.u32 %v1334, 4294901760
    %v1336 = vsub.f32 %v1334, %v1335
    %v1337 = vand.u32 %v1336, 4294901760
    %1338 = vmatpush1.msra.mxu0 %v1337
    %1339 = vmatprep.subr.mxu0 0.0
    %1340 = vmatpush2.msra.mxu0 0.0
    %1341 = vmatprep.subr.mxu0 0.0
    %1342 = vmatpush2.msra.mxu0 0.0
    %1343 = vmatprep.subr.mxu0 0.0
    %1344 = vmatpush2.msra.mxu0 0.0
    %1345 = vmatprep.subr.mxu0 0.0
    %1346 = vmatpush2.msra.mxu0 0.0
    %1347 = vmatprep.subr.mxu0 0.0
    %1348 = vmatpush2.msra.mxu0 0.0
    %1349 = vmatprep.subr.mxu0 0.0
    %1350 = vmatpush2.msra.mxu0 0.0
    %1351 = vmatprep.subr.mxu0 0.0
    %1352 = vmatpush2.msra.mxu0 0.0
    %1353 = vmatprep.subr.mxu0 0.0
    %1354 = vmatpush2.msra.mxu0 0.0
    %1355 = vmatprep.subr.mxu0 0.0
    %1356 = vmatpush2.msra.mxu0 0.0
    %1357 = vmatprep.subr.mxu0 0.0
    %1358 = vmatpush2.msra.mxu0 0.0
    %1359 = vmatprep.subr.mxu0 0.0
    %1360 = vmatpush2.msra.mxu0 0.0
    %1361 = vmatprep.subr.mxu0 0.0
    %1362 = vmatpush2.msra.mxu0 0.0
    %1363 = vmatprep.subr.mxu0 0.0
    %1364 = vmatpush2.msra.mxu0 0.0
    %1365 = vmatprep.subr.mxu0 0.0
    %1366 = vmatpush2.msra.mxu0 0.0
    %1367 = vmatprep.subr.mxu0 0.0
    %1368 = vmatpush2.msra.mxu0 0.0
    %1369 = vmatprep.subr.mxu0 0.0
    %1370 = vmatpush2.msra.mxu0 0.0
    %1371 = vmatprep.mubr.f32.mxu0 0.0
    %v1372 = vand.u32 %v1205, 4294901760
    %1373 = vmatmul.mubr.f32.gmra.mxu0 %v1372
    %v1374 = vpop.f32.mrf.mxu0
    %v1375 = vadd.f32 %v1284, %v1374
    %v1376 = vpop.f32.mrf.mxu0
    %1377 = vmatprep.mubr.f32.mxu0 0.0
    %v1378 = vand.u32 %v1208, 4294901760
    %1379 = vmatmul.mubr.f32.gmra.mxu0 %v1378
    %v1380 = vpop.f32.mrf.mxu0
    %v1381 = vadd.f32 %v1294, %v1380
    %v1382 = vpop.f32.mrf.mxu0
    %1383 = vdwg.mxu0
    %1384 = vmatprep.subr.mxu0 0.0
    %1385 = vmatpush1.msra.mxu0 0.0
    %1386 = vmatprep.subr.mxu0 0.0
    %1387 = vmatpush1.msra.mxu0 0.0
    %1388 = vmatprep.subr.mxu0 0.0
    %1389 = vmatpush1.msra.mxu0 0.0
    %1390 = vmatprep.subr.mxu0 0.0
    %1391 = vmatpush1.msra.mxu0 0.0
    %1392 = vmatprep.subr.mxu0 0.0
    %1393 = vmatpush1.msra.mxu0 0.0
    %1394 = vmatprep.subr.mxu0 0.0
    %1395 = vmatpush1.msra.mxu0 0.0
    %1396 = vmatprep.subr.mxu0 0.0
    %1397 = vmatpush1.msra.mxu0 0.0
    %1398 = vmatprep.subr.mxu0 0.0
    %1399 = vmatpush1.msra.mxu0 0.0
    %1400 = vmatprep.subr.mxu0 0.0
    %1401 = vmatpush1.msra.mxu0 0.0
    %1402 = vmatprep.subr.mxu0 0.0
    %1403 = vmatpush1.msra.mxu0 0.0
    %1404 = vmatprep.subr.mxu0 0.0
    %1405 = vmatpush1.msra.mxu0 0.0
    %1406 = vmatprep.subr.mxu0 0.0
    %1407 = vmatpush1.msra.mxu0 0.0
    %1408 = vmatprep.subr.mxu0 0.0
    %1409 = vmatpush1.msra.mxu0 0.0
    %1410 = vmatprep.subr.mxu0 0.0
    %1411 = vmatpush1.msra.mxu0 0.0
    %1412 = vmatprep.subr.mxu0 0.0
    %v1413 = vand.u32 %v1203, 4294901760
    %v1414 = vsub.f32 %v1203, %v1413
    %1415 = vmatpush1.msra.mxu0 %v1414
    %1416 = vmatprep.subr.mxu0 0.0
    %v1417 = vand.u32 %v1202, 4294901760
    %v1418 = vsub.f32 %v1202, %v1417
    %1419 = vmatpush1.msra.mxu0 %v1418
    %1420 = vmatprep.subr.mxu0 0.0
    %1421 = vmatpush2.msra.mxu0 0.0
    %1422 = vmatprep.subr.mxu0 0.0
    %1423 = vmatpush2.msra.mxu0 0.0
    %1424 = vmatprep.subr.mxu0 0.0
    %1425 = vmatpush2.msra.mxu0 0.0
    %1426 = vmatprep.subr.mxu0 0.0
    %1427 = vmatpush2.msra.mxu0 0.0
    %1428 = vmatprep.subr.mxu0 0.0
    %1429 = vmatpush2.msra.mxu0 0.0
    %1430 = vmatprep.subr.mxu0 0.0
    %1431 = vmatpush2.msra.mxu0 0.0
    %1432 = vmatprep.subr.mxu0 0.0
    %1433 = vmatpush2.msra.mxu0 0.0
    %1434 = vmatprep.subr.mxu0 0.0
    %1435 = vmatpush2.msra.mxu0 0.0
    %1436 = vmatprep.subr.mxu0 0.0
    %1437 = vmatpush2.msra.mxu0 0.0
    %1438 = vmatprep.subr.mxu0 0.0
    %1439 = vmatpush2.msra.mxu0 0.0
    %1440 = vmatprep.subr.mxu0 0.0
    %1441 = vmatpush2.msra.mxu0 0.0
    %1442 = vmatprep.subr.mxu0 0.0
    %1443 = vmatpush2.msra.mxu0 0.0
    %1444 = vmatprep.subr.mxu0 0.0
    %1445 = vmatpush2.msra.mxu0 0.0
    %1446 = vmatprep.subr.mxu0 0.0
    %1447 = vmatpush2.msra.mxu0 0.0
    %1448 = vmatprep.subr.mxu0 0.0
    %1449 = vmatpush2.msra.mxu0 0.0
    %1450 = vmatprep.subr.mxu0 0.0
    %1451 = vmatpush2.msra.mxu0 0.0
    %1452 = vmatprep.mubr.f32.mxu0 0.0
    %v1453 = vand.u32 %v1205, 4294901760
    %v1454 = vsub.f32 %v1205, %v1453
    %1455 = vmatmul.mubr.f32.gmra.mxu0 %v1454
    %v1456 = vpop.f32.mrf.mxu0
    %v1457 = vadd.f32 %v1375, %v1456
    %v1458 = vpop.f32.mrf.mxu0
    %1459 = vmatprep.mubr.f32.mxu0 0.0
    %v1460 = vand.u32 %v1208, 4294901760
    %v1461 = vsub.f32 %v1208, %v1460
    %1462 = vmatmul.mubr.f32.gmra.mxu0 %v1461
    %v1463 = vpop.f32.mrf.mxu0
    %v1464 = vadd.f32 %v1381, %v1463
    %v1465 = vpop.f32.mrf.mxu0
    %1466 = vdwg.mxu0
    %1467 = vmatprep.subr.mxu0 0.0
    %1468 = vmatpush1.msra.mxu0 0.0
    %1469 = vmatprep.subr.mxu0 0.0
    %1470 = vmatpush1.msra.mxu0 0.0
    %1471 = vmatprep.subr.mxu0 0.0
    %1472 = vmatpush1.msra.mxu0 0.0
    %1473 = vmatprep.subr.mxu0 0.0
    %1474 = vmatpush1.msra.mxu0 0.0
    %1475 = vmatprep.subr.mxu0 0.0
    %1476 = vmatpush1.msra.mxu0 0.0
    %1477 = vmatprep.subr.mxu0 0.0
    %1478 = vmatpush1.msra.mxu0 0.0
    %1479 = vmatprep.subr.mxu0 0.0
    %1480 = vmatpush1.msra.mxu0 0.0
    %1481 = vmatprep.subr.mxu0 0.0
    %1482 = vmatpush1.msra.mxu0 0.0
    %1483 = vmatprep.subr.mxu0 0.0
    %1484 = vmatpush1.msra.mxu0 0.0
    %1485 = vmatprep.subr.mxu0 0.0
    %1486 = vmatpush1.msra.mxu0 0.0
    %1487 = vmatprep.subr.mxu0 0.0
    %1488 = vmatpush1.msra.mxu0 0.0
    %1489 = vmatprep.subr.mxu0 0.0
    %1490 = vmatpush1.msra.mxu0 0.0
    %1491 = vmatprep.subr.mxu0 0.0
    %1492 = vmatpush1.msra.mxu0 0.0
    %1493 = vmatprep.subr.mxu0 0.0
    %1494 = vmatpush1.msra.mxu0 0.0
    %1495 = vmatprep.subr.mxu0 0.0
    %v1496 = vand.u32 %v1203, 4294901760
    %1497 = vmatpush1.msra.mxu0 %v1496
    %1498 = vmatprep.subr.mxu0 0.0
    %v1499 = vand.u32 %v1202, 4294901760
    %1500 = vmatpush1.msra.mxu0 %v1499
    %1501 = vmatprep.subr.mxu0 0.0
    %1502 = vmatpush2.msra.mxu0 0.0
    %1503 = vmatprep.subr.mxu0 0.0
    %1504 = vmatpush2.msra.mxu0 0.0
    %1505 = vmatprep.subr.mxu0 0.0
    %1506 = vmatpush2.msra.mxu0 0.0
    %1507 = vmatprep.subr.mxu0 0.0
    %1508 = vmatpush2.msra.mxu0 0.0
    %1509 = vmatprep.subr.mxu0 0.0
    %1510 = vmatpush2.msra.mxu0 0.0
    %1511 = vmatprep.subr.mxu0 0.0
    %1512 = vmatpush2.msra.mxu0 0.0
    %1513 = vmatprep.subr.mxu0 0.0
    %1514 = vmatpush2.msra.mxu0 0.0
    %1515 = vmatprep.subr.mxu0 0.0
    %1516 = vmatpush2.msra.mxu0 0.0
    %1517 = vmatprep.subr.mxu0 0.0
    %1518 = vmatpush2.msra.mxu0 0.0
    %1519 = vmatprep.subr.mxu0 0.0
    %1520 = vmatpush2.msra.mxu0 0.0
    %1521 = vmatprep.subr.mxu0 0.0
    %1522 = vmatpush2.msra.mxu0 0.0
    %1523 = vmatprep.subr.mxu0 0.0
    %1524 = vmatpush2.msra.mxu0 0.0
    %1525 = vmatprep.subr.mxu0 0.0
    %1526 = vmatpush2.msra.mxu0 0.0
    %1527 = vmatprep.subr.mxu0 0.0
    %1528 = vmatpush2.msra.mxu0 0.0
    %1529 = vmatprep.subr.mxu0 0.0
    %1530 = vmatpush2.msra.mxu0 0.0
    %1531 = vmatprep.subr.mxu0 0.0
    %1532 = vmatpush2.msra.mxu0 0.0
    %1533 = vmatprep.mubr.f32.mxu0 0.0
    %v1534 = vand.u32 %v1205, 4294901760
    %v1535 = vsub.f32 %v1205, %v1534
    %v1536 = vand.u32 %v1535, 4294901760
    %1537 = vmatmul.mubr.f32.gmra.mxu0 %v1536
    %v1538 = vpop.f32.mrf.mxu0
    %v1539 = vadd.f32 %v1457, %v1538
    %v1540 = vpop.f32.mrf.mxu0
    %1541 = vmatprep.mubr.f32.mxu0 0.0
    %v1542 = vand.u32 %v1208, 4294901760
    %v1543 = vsub.f32 %v1208, %v1542
    %v1544 = vand.u32 %v1543, 4294901760
    %1545 = vmatmul.mubr.f32.gmra.mxu0 %v1544
    %v1546 = vpop.f32.mrf.mxu0
    %v1547 = vadd.f32 %v1464, %v1546
    %v1548 = vpop.f32.mrf.mxu0
    %1549 = vdwg.mxu0
    %1550 = vmatprep.subr.mxu0 0.0
    %1551 = vmatpush1.msra.mxu0 0.0
    %1552 = vmatprep.subr.mxu0 0.0
    %1553 = vmatpush1.msra.mxu0 0.0
    %1554 = vmatprep.subr.mxu0 0.0
    %1555 = vmatpush1.msra.mxu0 0.0
    %1556 = vmatprep.subr.mxu0 0.0
    %1557 = vmatpush1.msra.mxu0 0.0
    %1558 = vmatprep.subr.mxu0 0.0
    %1559 = vmatpush1.msra.mxu0 0.0
    %1560 = vmatprep.subr.mxu0 0.0
    %1561 = vmatpush1.msra.mxu0 0.0
    %1562 = vmatprep.subr.mxu0 0.0
    %1563 = vmatpush1.msra.mxu0 0.0
    %1564 = vmatprep.subr.mxu0 0.0
    %1565 = vmatpush1.msra.mxu0 0.0
    %1566 = vmatprep.subr.mxu0 0.0
    %1567 = vmatpush1.msra.mxu0 0.0
    %1568 = vmatprep.subr.mxu0 0.0
    %1569 = vmatpush1.msra.mxu0 0.0
    %1570 = vmatprep.subr.mxu0 0.0
    %1571 = vmatpush1.msra.mxu0 0.0
    %1572 = vmatprep.subr.mxu0 0.0
    %1573 = vmatpush1.msra.mxu0 0.0
    %1574 = vmatprep.subr.mxu0 0.0
    %1575 = vmatpush1.msra.mxu0 0.0
    %1576 = vmatprep.subr.mxu0 0.0
    %1577 = vmatpush1.msra.mxu0 0.0
    %1578 = vmatprep.subr.mxu0 0.0
    %v1579 = vand.u32 %v1203, 4294901760
    %v1580 = vsub.f32 %v1203, %v1579
    %v1581 = vand.u32 %v1580, 4294901760
    %1582 = vmatpush1.msra.mxu0 %v1581
    %1583 = vmatprep.subr.mxu0 0.0
    %v1584 = vand.u32 %v1202, 4294901760
    %v1585 = vsub.f32 %v1202, %v1584
    %v1586 = vand.u32 %v1585, 4294901760
    %1587 = vmatpush1.msra.mxu0 %v1586
    %1588 = vmatprep.subr.mxu0 0.0
    %1589 = vmatpush2.msra.mxu0 0.0
    %1590 = vmatprep.subr.mxu0 0.0
    %1591 = vmatpush2.msra.mxu0 0.0
    %1592 = vmatprep.subr.mxu0 0.0
    %1593 = vmatpush2.msra.mxu0 0.0
    %1594 = vmatprep.subr.mxu0 0.0
    %1595 = vmatpush2.msra.mxu0 0.0
    %1596 = vmatprep.subr.mxu0 0.0
    %1597 = vmatpush2.msra.mxu0 0.0
    %1598 = vmatprep.subr.mxu0 0.0
    %1599 = vmatpush2.msra.mxu0 0.0
    %1600 = vmatprep.subr.mxu0 0.0
    %1601 = vmatpush2.msra.mxu0 0.0
    %1602 = vmatprep.subr.mxu0 0.0
    %1603 = vmatpush2.msra.mxu0 0.0
    %1604 = vmatprep.subr.mxu0 0.0
    %1605 = vmatpush2.msra.mxu0 0.0
    %1606 = vmatprep.subr.mxu0 0.0
    %1607 = vmatpush2.msra.mxu0 0.0
    %1608 = vmatprep.subr.mxu0 0.0
    %1609 = vmatpush2.msra.mxu0 0.0
    %1610 = vmatprep.subr.mxu0 0.0
    %1611 = vmatpush2.msra.mxu0 0.0
    %1612 = vmatprep.subr.mxu0 0.0
    %1613 = vmatpush2.msra.mxu0 0.0
    %1614 = vmatprep.subr.mxu0 0.0
    %1615 = vmatpush2.msra.mxu0 0.0
    %1616 = vmatprep.subr.mxu0 0.0
    %1617 = vmatpush2.msra.mxu0 0.0
    %1618 = vmatprep.subr.mxu0 0.0
    %1619 = vmatpush2.msra.mxu0 0.0
    %1620 = vmatprep.mubr.f32.mxu0 0.0
    %v1621 = vand.u32 %v1205, 4294901760
    %1622 = vmatmul.mubr.f32.gmra.mxu0 %v1621
    %v1623 = vpop.f32.mrf.mxu0
    %v1624 = vadd.f32 %v1539, %v1623
    %v1625 = vpop.f32.mrf.mxu0
    %1626 = vmatprep.mubr.f32.mxu0 0.0
    %v1627 = vand.u32 %v1208, 4294901760
    %1628 = vmatmul.mubr.f32.gmra.mxu0 %v1627
    %v1629 = vpop.f32.mrf.mxu0
    %v1630 = vadd.f32 %v1547, %v1629
    %v1631 = vpop.f32.mrf.mxu0
    %1632 = vdwg.mxu0
    %1633 = vmatprep.subr.mxu0 0.0
    %1634 = vmatpush1.msra.mxu0 0.0
    %1635 = vmatprep.subr.mxu0 0.0
    %1636 = vmatpush1.msra.mxu0 0.0
    %1637 = vmatprep.subr.mxu0 0.0
    %1638 = vmatpush1.msra.mxu0 0.0
    %1639 = vmatprep.subr.mxu0 0.0
    %1640 = vmatpush1.msra.mxu0 0.0
    %1641 = vmatprep.subr.mxu0 0.0
    %1642 = vmatpush1.msra.mxu0 0.0
    %1643 = vmatprep.subr.mxu0 0.0
    %1644 = vmatpush1.msra.mxu0 0.0
    %1645 = vmatprep.subr.mxu0 0.0
    %1646 = vmatpush1.msra.mxu0 0.0
    %1647 = vmatprep.subr.mxu0 0.0
    %1648 = vmatpush1.msra.mxu0 0.0
    %1649 = vmatprep.subr.mxu0 0.0
    %1650 = vmatpush1.msra.mxu0 0.0
    %1651 = vmatprep.subr.mxu0 0.0
    %1652 = vmatpush1.msra.mxu0 0.0
    %1653 = vmatprep.subr.mxu0 0.0
    %1654 = vmatpush1.msra.mxu0 0.0
    %1655 = vmatprep.subr.mxu0 0.0
    %1656 = vmatpush1.msra.mxu0 0.0
    %1657 = vmatprep.subr.mxu0 0.0
    %1658 = vmatpush1.msra.mxu0 0.0
    %1659 = vmatprep.subr.mxu0 0.0
    %1660 = vmatpush1.msra.mxu0 0.0
    %1661 = vmatprep.subr.mxu0 0.0
    %v1662 = vand.u32 %v1203, 4294901760
    %1663 = vmatpush1.msra.mxu0 %v1662
    %1664 = vmatprep.subr.mxu0 0.0
    %v1665 = vand.u32 %v1202, 4294901760
    %1666 = vmatpush1.msra.mxu0 %v1665
    %1667 = vmatprep.subr.mxu0 0.0
    %1668 = vmatpush2.msra.mxu0 0.0
    %1669 = vmatprep.subr.mxu0 0.0
    %1670 = vmatpush2.msra.mxu0 0.0
    %1671 = vmatprep.subr.mxu0 0.0
    %1672 = vmatpush2.msra.mxu0 0.0
    %1673 = vmatprep.subr.mxu0 0.0
    %1674 = vmatpush2.msra.mxu0 0.0
    %1675 = vmatprep.subr.mxu0 0.0
    %1676 = vmatpush2.msra.mxu0 0.0
    %1677 = vmatprep.subr.mxu0 0.0
    %1678 = vmatpush2.msra.mxu0 0.0
    %1679 = vmatprep.subr.mxu0 0.0
    %1680 = vmatpush2.msra.mxu0 0.0
    %1681 = vmatprep.subr.mxu0 0.0
    %1682 = vmatpush2.msra.mxu0 0.0
    %1683 = vmatprep.subr.mxu0 0.0
    %1684 = vmatpush2.msra.mxu0 0.0
    %1685 = vmatprep.subr.mxu0 0.0
    %1686 = vmatpush2.msra.mxu0 0.0
    %1687 = vmatprep.subr.mxu0 0.0
    %1688 = vmatpush2.msra.mxu0 0.0
    %1689 = vmatprep.subr.mxu0 0.0
    %1690 = vmatpush2.msra.mxu0 0.0
    %1691 = vmatprep.subr.mxu0 0.0
    %1692 = vmatpush2.msra.mxu0 0.0
    %1693 = vmatprep.subr.mxu0 0.0
    %1694 = vmatpush2.msra.mxu0 0.0
    %1695 = vmatprep.subr.mxu0 0.0
    %1696 = vmatpush2.msra.mxu0 0.0
    %1697 = vmatprep.subr.mxu0 0.0
    %1698 = vmatpush2.msra.mxu0 0.0
    %1699 = vmatprep.mubr.f32.mxu0 0.0
    %v1700 = vand.u32 %v1205, 4294901760
    %1701 = vmatmul.mubr.f32.gmra.mxu0 %v1700
    %v1702 = vpop.f32.mrf.mxu0
    %v1703 = vadd.f32 %v1624, %v1702
    %v1704 = vpop.f32.mrf.mxu0
    %1705 = vmatprep.mubr.f32.mxu0 0.0
    %v1706 = vand.u32 %v1208, 4294901760
    %1707 = vmatmul.mubr.f32.gmra.mxu0 %v1706
    %v1708 = vpop.f32.mrf.mxu0
    %v1709 = vadd.f32 %v1630, %v1708
    %v1710 = vpop.f32.mrf.mxu0
    %1711 = vdwg.mxu0
    %v1712 = vadd.f32 %v1198, %v1703
    %v1713 = vadd.f32 %v1199, %v1709
    %1714 = vst [vmem:[#allocation16] sm:$0xff] %v1712
    %1715 = vst [vmem:[#allocation16 + $0x8] sm:$0xff] %v1713
    // Predicated region
    $region50: #{tpu_custom_call.1} parent=1 // pred_check
      _
    $region51: #{tpu_custom_call.1} parent=1 // pred_check_branch
      %1717 = sbr.rel (0) target = $region53
    $region52: #{tpu_custom_call.1} parent=1 // pred_region
      %s1719 = ssub.s32 256, 256
      %1720 = vsyncadd [#allocation6], %s1719
      %s1721 = sshll.u32 [#allocation16], 4
      %s1722 = int_to_ptr.vmem [resolvable:$true] %s1721
      %1727 = dma.vmem_to_hbm [thread:$0]  %s1722, 256, %s6, [#allocation6], 128, 128, 8
    $region53: #{tpu_custom_call.1} parent=1 // pred_fallthru
      _
    // Predicated region
    $region54: #{tpu_custom_call.1} parent=1 // pred_check
      _
    $region55: #{tpu_custom_call.1} parent=1 // pred_check_branch
      %1729 = sbr.rel (0) target = $region57
    $region56: #{tpu_custom_call.1} parent=1 // pred_region
      %s1731 = ssub.s32 256, 256
      %1732 = vsyncadd [#allocation18], %s1731
      %s1733 = sshll.u32 [#allocation17], 4
      %s1734 = int_to_ptr.vmem [resolvable:$true] %s1733
      %1739 = dma.vmem_to_hbm [thread:$0]  %s1734, 256, %s7, [#allocation18], 128, 128, 8
    $region57: #{tpu_custom_call.1} parent=1 // pred_fallthru
      _
    // Predicated region
    $region58: #{tpu_custom_call.1} parent=1 // pred_check
      _
    $region59: #{tpu_custom_call.1} parent=1 // pred_check_branch
      %1741 = sbr.rel (0) target = $region61
    $region60: #{tpu_custom_call.1} parent=1 // pred_region
      %1742 = dma.done [#allocation6], 256
    $region61: #{tpu_custom_call.1} parent=1 // pred_fallthru
      _
    // Predicated region
    $region62: #{tpu_custom_call.1} parent=1 // pred_check
      _
    $region63: #{tpu_custom_call.1} parent=1 // pred_check_branch
      %1744 = sbr.rel (0) target = $region65
    $region64: #{tpu_custom_call.1} parent=1 // pred_region
      %1745 = dma.done [#allocation18], 256
    $region65: #{tpu_custom_call.1} parent=1 // pred_fallthru
      _
    %1746 = vsyncpa [#allocation5], 1
    %1747 = vsyncpa [#allocation9], 1
    %1748 = vsyncpa [#allocation12], 1
    %1749 = vsyncpa [#allocation6], 1
    %1750 = vsyncpa [#allocation18], 1
    %1751 = vsyncpa [#allocation7], 1
    %1752 = vsyncpa [#allocation15], 1

</llo_original>
